<compile_context>
chip_gen: v5e
topology: v5e:2x2
jax: 0.10.0
libtpu: 0.0.40
codegen_flags: <defaults>
</compile_context>

<pallas_src>
import numpy as np
import jax
import jax.numpy as jnp
from jax import lax
from jax.experimental import pallas as pl
from jax.experimental.pallas import tpu as pltpu  # noqa: F401  (TPU backend)


# ----------------------------------------------------------------------------
# Host-side slab packing helpers (run once, outside jit)
# ----------------------------------------------------------------------------
class SlabBuilder:
    """Packs many small 2-D f32 matrices into one tall slab (row-aligned to 8)."""

    def __init__(self, width):
        self.width = width
        self.bufs = []
        self.offset = 0

    def add(self, mat):
        mat = np.asarray(mat, np.float32)
        if mat.ndim == 1:
            mat = mat.reshape(1, -1)
        r, c = mat.shape
        assert c <= self.width, (c, self.width)
        r_pad = int(np.ceil(r / 8) * 8)
        buf = np.zeros((r_pad, self.width), np.float32)
        buf[:r, :c] = mat
        off = self.offset
        self.bufs.append(buf)
        self.offset += r_pad
        return off

    def finalize(self):
        return jnp.asarray(np.concatenate(self.bufs, axis=0))


def _build_wproj(w_tt, w_ts, w_st, w_ss, chunk_widths):
    """NodeEdgeInt projection weight for the staggered dense-history layout.

    H columns per chunk c: [t-features(w_c) | s-features(w_c)].
    Output columns: [0:out]   -> node rows: X_t0 @ w_tt ; edge rows: X_s0 @ w_st
                    [out:2o]  -> node rows: X_t0 @ w_ts ; edge rows: X_s0 @ w_ss
    """
    w_tt, w_ts = np.asarray(w_tt, np.float32), np.asarray(w_ts, np.float32)
    w_st, w_ss = np.asarray(w_st, np.float32), np.asarray(w_ss, np.float32)
    K, out = w_tt.shape
    assert sum(chunk_widths) == K
    Wp = np.zeros((2 * K, 2 * out), np.float32)
    off, pos = 0, 0
    for w in chunk_widths:
        Wp[pos:pos + w, :out] = w_tt[off:off + w]
        Wp[pos:pos + w, out:] = w_ts[off:off + w]
        Wp[pos + w:pos + 2 * w, :out] = w_st[off:off + w]
        Wp[pos + w:pos + 2 * w, out:] = w_ss[off:off + w]
        off += w
        pos += 2 * w
    return Wp


def _fold_scale(w, sc):
    return np.asarray(w, np.float32) * np.asarray(sc, np.float32)[None, :]


def _fold_shift(b, sc, sh):
    return (np.asarray(b, np.float32) * np.asarray(sc, np.float32)
            + np.asarray(sh, np.float32)).reshape(1, -1)


def pack_model(params, channels, filters):
    """Fold eval-mode BN and pack all weights/shifts into two slabs."""
    wb = SlabBuilder(128)
    bb = SlabBuilder(128)
    C0 = filters[0]

    pt, ps = params['init_t'], params['init_s']
    w_init = np.concatenate([_fold_scale(pt['w0'], pt['bn_scale']),
                             _fold_scale(ps['w0'], ps['bn_scale'])], axis=0)
    init = dict(w=wb.add(w_init),
                sh_t=bb.add(_fold_shift(pt['b'], pt['bn_scale'], pt['bn_shift'])),
                sh_s=bb.add(_fold_shift(ps['b'], ps['bn_scale'], ps['bn_shift'])))

    layers = []
    chunk_widths = [C0]
    for i in range(len(channels)):
        out = filters[i]
        for j in range(channels[i]):
            lp = params['blocks'][i][j]
            ne, ct, cs = lp['neint'], lp['conv_t'], lp['conv_s']
            K = sum(chunk_widths)
            Wp = _build_wproj(ne['w_tt'], ne['w_ts'], ne['w_st'], ne['w_ss'],
                              chunk_widths)
            W01 = np.concatenate([_fold_scale(ct['w0'], ct['bn_scale']),
                                  _fold_scale(cs['w0'], cs['bn_scale']),
                                  _fold_scale(ct['w1'], ct['bn_scale']),
                                  _fold_scale(cs['w1'], cs['bn_scale'])], axis=0)
            bias_row = np.concatenate([np.asarray(ne['b_t'], np.float32),
                                       np.asarray(ne['b_s'], np.float32)]).reshape(1, -1)
            layers.append(dict(
                K=K, out=out,
                w_proj=wb.add(Wp), w01=wb.add(W01),
                bias=bb.add(bias_row),
                sh_t=bb.add(_fold_shift(ct['b'], ct['bn_scale'], ct['bn_shift'])),
                sh_s=bb.add(_fold_shift(cs['b'], cs['bn_scale'], cs['bn_shift']))))
            chunk_widths.append(out)

    mlps = []
    in_dim = filters[-1] * 2
    for m in params['mlps']:
        out_dim = int(np.asarray(m['w']).shape[1])
        mlps.append(dict(in_=in_dim, out=out_dim,
                         w=wb.add(_fold_scale(m['w'], m['bn_scale'])),
                         sh=bb.add(_fold_shift(m['b'], m['bn_scale'], m['bn_shift']))))
        in_dim = out_dim

    num_classes = int(np.asarray(params['out']['w']).shape[1])
    out_spec = dict(in_=in_dim, out=num_classes,
                    w=wb.add(np.asarray(params['out']['w'], np.float32)),
                    b=bb.add(np.asarray(params['out']['b'], np.float32).reshape(1, -1)))

    plan = dict(C0=C0, init=init, layers=layers, mlps=mlps, out=out_spec,
                num_classes=num_classes)
    return wb.finalize(), bb.finalize(), plan


def pack_graph(edge_index, L0, L1, num_node1, num_edge1):
    """Row-stacked graph operators: blockdiag Laplacian, cross aggregation, pools."""
    N = int(L0.shape[0])
    E = int(L1.shape[0])
    NE = N + E
    G = len(num_node1)

    edge_index = np.asarray(edge_index, np.int64)
    e = np.arange(E)
    par1 = np.zeros((N, E), np.float32)
    par1[edge_index[0], e] = -1.0
    par1[edge_index[1], e] = 1.0
    deg = np.maximum(np.bincount(edge_index.reshape(-1), minlength=N)
                     .astype(np.float32), 1.0)

    L_comb = np.zeros((NE, NE), np.float32)
    L_comb[:N, :N] = L0
    L_comb[N:, N:] = L1

    # TODO(synk): exact NodeEdgeInt source unavailable; degree-normalised
    # incidence aggregation (edge->node = |par1|/deg, node->edge = 0.5*|par1|^T).
    A_comb = np.zeros((NE, NE), np.float32)
    A_comb[:N, N:] = np.abs(par1) / deg[:, None]
    A_comb[N:, :N] = 0.5 * np.abs(par1).T

    pool_n = np.zeros((G, NE), np.float32)
    pool_s = np.zeros((G, NE), np.float32)
    off = 0
    for g, nn_ in enumerate(num_node1):
        pool_n[g, off:off + nn_] = 1.0 / nn_
        off += nn_
    off = N
    for g, ne_ in enumerate(num_edge1):
        pool_s[g, off:off + ne_] = 1.0 / ne_
        off += ne_

    gb = SlabBuilder(NE)
    gmeta = dict(N=N, E=E, NE=NE, G=G,
                 L=gb.add(L_comb), A=gb.add(A_comb),
                 pool_s=gb.add(pool_s), pool_n=gb.add(pool_n))
    return gb.finalize(), gmeta


def build_stagger_input(params, x_t_raw, x_s_raw, C0):
    """Embedding gather + column-staggered (NE, 2*C0) init-conv input."""
    emb = np.asarray(params['node_embedding'], np.float32)
    xt = np.asarray(x_t_raw, np.float32)
    xs = np.asarray(x_s_raw, np.float32)
    emb_t = emb[xt[:, 0].astype(np.int32)]
    emb_s = emb[xs[:, 0].astype(np.int32)]  # module uses node_embedding for x_s too
    x_t_in = np.concatenate([emb_t, xt[:, 1:]], axis=-1).astype(np.float32)
    x_s_in = np.concatenate([emb_s, xs[:, 1:]], axis=-1).astype(np.float32)
    N, E = x_t_in.shape[0], x_s_in.shape[0]
    x_stag = np.zeros((N + E, 2 * C0), np.float32)
    x_stag[:N, :C0] = x_t_in
    x_stag[N:, C0:] = x_s_in
    return jnp.asarray(x_stag)


# ----------------------------------------------------------------------------
# Single fused Pallas kernel for the whole forward pass
# ----------------------------------------------------------------------------
def make_kernel(plan, gmeta):
    N, NE, G = gmeta['N'], gmeta['NE'], gmeta['G']
    C0 = plan['C0']
    n_layers = len(plan['layers'])

    def mm(a, b):
        return jnp.dot(a, b, preferred_element_type=jnp.float32)

    def kernel(x_ref, w_ref, b_ref, g_ref, o_ref):
        L_comb = g_ref[gmeta['L']:gmeta['L'] + NE, :]
        A_comb = g_ref[gmeta['A']:gmeta['A'] + NE, :]
        pool_s = g_ref[gmeta['pool_s']:gmeta['pool_s'] + G, :]
        pool_n = g_ref[gmeta['pool_n']:gmeta['pool_n'] + G, :]

        # HL_init_conv: K=1 Laguerre (Linear) + folded BN + ReLU.  Both streams
        # in ONE matmul via the column-staggered input and stacked weight.
        ini = plan['init']
        w0 = w_ref[ini['w']:ini['w'] + 2 * C0, :C0]
        h = mm(x_ref[...], w0)                                    # (NE, C0)
        row0 = lax.broadcasted_iota(jnp.int32, (NE, C0), 0)
        sh0 = jnp.where(row0 < N,
                        b_ref[ini['sh_t']:ini['sh_t'] + 1, :C0],
                        b_ref[ini['sh_s']:ini['sh_s'] + 1, :C0])
        h = jnp.maximum(h + sh0, 0.0)

        # Dense-connection history, column-staggered per chunk.
        H = jnp.concatenate([jnp.where(row0 < N, h, 0.0),
                             jnp.where(row0 < N, 0.0, h)], axis=-1)   # (NE, 2*C0)

        Y = h
        for li, lp in enumerate(plan['layers']):
            K, out = lp['K'], lp['out']
            Wp = w_ref[lp['w_proj']:lp['w_proj'] + 2 * K, :2 * out]
            W01 = w_ref[lp['w01']:lp['w01'] + 4 * out, :out]
            brow = b_ref[lp['bias']:lp['bias'] + 1, :2 * out]
            sh_t = b_ref[lp['sh_t']:lp['sh_t'] + 1, :out]
            sh_s = b_ref[lp['sh_s']:lp['sh_s'] + 1, :out]

            # NodeEdgeInt: direct + cross projections of BOTH streams fused in
            # one matmul; one aggregation matmul against A_comb.
            P = mm(H, Wp)                                         # (NE, 2*out)
            S = P + mm(A_comb, P) + brow
            r2 = lax.broadcasted_iota(jnp.int32, (NE, 2 * out), 0)
            c2 = lax.broadcasted_iota(jnp.int32, (NE, 2 * out), 1)
            Z = jnp.where((r2 < N) == (c2 < out), S, 0.0)         # staggered x_new

            # NEConv: K=2 Hodge-Laguerre conv + folded BN + ReLU (Dropout p=0).
            # [x | x - L@x] lane-concat x stacked (4*out, out) weight.
            LZ = mm(L_comb, Z)
            U = jnp.concatenate([Z, Z - LZ], axis=-1)             # (NE, 4*out)
            r1 = lax.broadcasted_iota(jnp.int32, (NE, out), 0)
            shc = jnp.where(r1 < N, sh_t, sh_s)
            Y = jnp.maximum(mm(U, W01) + shc, 0.0)                # (NE, out)

            # Dense connection: append the new staggered features.
            if li + 1 < n_layers:
                Y_stag = jnp.concatenate([jnp.where(r1 < N, Y, 0.0),
                                          jnp.where(r1 < N, 0.0, Y)], axis=-1)
                H = jnp.concatenate([H, Y_stag], axis=-1)

        # Readout on the LAST conv outputs: [mean_s | mean_t] per graph.
        g_s = mm(pool_s, Y)
        g_t = mm(pool_n, Y)
        x = jnp.concatenate([g_s, g_t], axis=-1)                  # (G, 2*F_last)
        for mp in plan['mlps']:
            w = w_ref[mp['w']:mp['w'] + mp['in_'], :mp['out']]
            shm = b_ref[mp['sh']:mp['sh'] + 1, :mp['out']]
            x = jnp.maximum(mm(x, w) + shm, 0.0)
        od = plan['out']
        w_o = w_ref[od['w']:od['w'] + od['in_'], :od['out']]
        b_o = b_ref[od['b']:od['b'] + 1, :od['out']]
        o_ref[...] = mm(x, w_o) + b_o

    return kernel


def make_forward(plan, gmeta):
    kernel = make_kernel(plan, gmeta)

    @jax.jit
    def fwd(x_stag, w_slab, b_slab, g_slab):
        return pl.pallas_call(
            kernel,
            out_shape=jax.ShapeDtypeStruct((gmeta['G'], plan['num_classes']),
                                           jnp.float32),
        )(x_stag, w_slab, b_slab, g_slab)

    return fwd


# ----------------------------------------------------------------------------
# Parameters (deterministic, shapes mirror the PyTorch __init__)
# ----------------------------------------------------------------------------
def make_params(key, channels, filters, keig=7, mlp_channels=(), num_classes=1,
                node_vocab=28, edge_vocab=4):
    eps = 1e-5
    init_ch = filters[0]
    kidx = [0]

    def nk():
        kidx[0] += 1
        return jax.random.fold_in(key, kidx[0])

    def glorot(shape):
        std = float(np.sqrt(2.0 / (shape[0] + shape[1])))
        return (std * jax.random.normal(nk(), shape)).astype(jnp.float32)

    def bn(c):  # eval-mode BatchNorm (default running stats) folded to scale/shift
        return ((jnp.ones((c,)) / np.sqrt(1.0 + eps)).astype(jnp.float32),
                jnp.zeros((c,), jnp.float32))

    params = {}
    params['node_embedding'] = jax.random.normal(
        nk(), (node_vocab, init_ch - keig), dtype=jnp.float32)
    # edge_embedding exists in the module but is unused in forward; kept for parity
    params['edge_embedding'] = jax.random.normal(
        nk(), (edge_vocab, init_ch - keig), dtype=jnp.float32)

    sc, sh = bn(init_ch)
    params['init_t'] = {'w0': glorot((init_ch, init_ch)),
                        'b': jnp.zeros((init_ch,), jnp.float32),
                        'bn_scale': sc, 'bn_shift': sh}
    sc, sh = bn(init_ch)
    params['init_s'] = {'w0': glorot((init_ch, init_ch)),
                        'b': jnp.zeros((init_ch,), jnp.float32),
                        'bn_scale': sc, 'bn_shift': sh}

    blocks = []
    insize = init_ch
    for i, outsize in enumerate(filters):
        layers = []
        for _ in range(channels[i]):
            sct, sht = bn(outsize)
            scs, shs = bn(outsize)
            layer = {
                'neint': {'w_tt': glorot((insize, outsize)),
                          'w_st': glorot((insize, outsize)),
                          'b_t': jnp.zeros((outsize,), jnp.float32),
                          'w_ss': glorot((insize, outsize)),
                          'w_ts': glorot((insize, outsize)),
                          'b_s': jnp.zeros((outsize,), jnp.float32)},
                'conv_t': {'w0': glorot((outsize, outsize)),
                           'w1': glorot((outsize, outsize)),
                           'b': jnp.zeros((outsize,), jnp.float32),
                           'bn_scale': sct, 'bn_shift': sht},
                'conv_s': {'w0': glorot((outsize, outsize)),
                           'w1': glorot((outsize, outsize)),
                           'b': jnp.zeros((outsize,), jnp.float32),
                           'bn_scale': scs, 'bn_shift': shs},
            }
            layers.append(layer)
            insize = outsize + insize
        blocks.append(layers)
    params['blocks'] = blocks

    mlp_insize = filters[-1] * 2
    mlps = []
    for outc in mlp_channels:
        sc, sh = bn(outc)
        mlps.append({'w': glorot((mlp_insize, outc)),
                     'b': jnp.zeros((outc,), jnp.float32),
                     'bn_scale': sc, 'bn_shift': sh})
        mlp_insize = outc
    params['mlps'] = mlps
    params['out'] = {'w': glorot((mlp_insize, num_classes)),
                     'b': jnp.zeros((num_classes,), jnp.float32)}
    return params


# ----------------------------------------------------------------------------
# Main
# ----------------------------------------------------------------------------
if __name__ == "__main__":
    channels = [1, 1, 1, 1]
    filters = [32, 32, 64, 64]
    keig = 7

    root = jax.random.PRNGKey(0)
    params = make_params(root, channels, filters, keig=keig)

    # two small molecule-like graphs
    num_node1 = [6, 8]
    num_edge1 = [7, 10]
    edges = [(0, 1), (1, 2), (2, 3), (3, 4), (4, 5), (5, 0), (0, 3)]
    edges += [(6, 7), (7, 8), (8, 9), (9, 10), (10, 11), (11, 12), (12, 13),
              (13, 6), (6, 9), (8, 12)]
    edge_index = np.asarray(edges, dtype=np.int32).T                # [2, E]
    N = sum(num_node1)
    E = sum(num_edge1)

    # dense Hodge Laplacians: L0 = D - A (nodes), L1 = B1^T B1 (edges), normalised
    A = np.zeros((N, N), np.float32)
    for a, b in edges:
        A[a, b] = 1.0
        A[b, a] = 1.0
    L0 = np.diag(A.sum(1)) - A
    L0 = L0 / max(float(np.max(np.diag(L0))), 1.0)
    B1 = np.zeros((N, E), np.float32)
    for e_, (a, b) in enumerate(edges):
        B1[a, e_] = -1.0
        B1[b, e_] = 1.0
    L1 = B1.T @ B1
    L1 = L1 / max(float(np.max(np.diag(L1))), 1.0)

    k1, k2, k3, k4 = jax.random.split(jax.random.PRNGKey(0), 4)
    x_t_raw = np.concatenate(
        [np.asarray(jax.random.randint(k1, (N, 1), 0, 28), np.float32),
         np.asarray(jax.random.normal(k2, (N, keig)), np.float32)], axis=-1)
    x_s_raw = np.concatenate(
        [np.asarray(jax.random.randint(k3, (E, 1), 0, 4), np.float32),
         np.asarray(jax.random.normal(k4, (E, keig)), np.float32)], axis=-1)

    # one-time host-side packing (hoisted out of the jitted forward)
    w_slab, b_slab, plan = pack_model(params, channels, filters)
    g_slab, gmeta = pack_graph(edge_index, L0, L1, num_node1, num_edge1)
    x_stag = build_stagger_input(params, x_t_raw, x_s_raw, filters[0])

    fwd = make_forward(plan, gmeta)
    out = fwd(x_stag, w_slab, b_slab, g_slab)
    out = jax.block_until_ready(out)

    G = len(num_node1)
    assert out.shape == (G, 1), out.shape
    assert bool(jnp.all(jnp.isfinite(out)))
    print("KERNEL_OK")
</pallas_src>

<mosaic_0001>
module attributes {stable_mosaic.version = 11 : i64} {
  func.func @kernel(%arg0: memref<31x64xf32, #tpu.memory_space<vmem>>, %arg1: memref<1664x128xf32, #tpu.memory_space<vmem>>, %arg2: memref<120x128xf32, #tpu.memory_space<vmem>>, %arg3: memref<80x31xf32, #tpu.memory_space<vmem>>, %arg4: memref<2x1xf32, #tpu.memory_space<vmem>>) attributes {dimension_semantics = [], scalar_prefetch = 0 : i64, scratch_operands = 0 : i64, tpu.core_type = #tpu.core_type<tc>} {
    %c0 = arith.constant 0 : index
    %c0_0 = arith.constant 0 : index
    %0 = vector.load %arg3[%c0, %c0_0] : memref<80x31xf32, #tpu.memory_space<vmem>>, vector<31x31xf32>
    %c32 = arith.constant 32 : index
    %c0_1 = arith.constant 0 : index
    %1 = vector.load %arg3[%c32, %c0_1] : memref<80x31xf32, #tpu.memory_space<vmem>>, vector<31x31xf32>
    %c64 = arith.constant 64 : index
    %c0_2 = arith.constant 0 : index
    %2 = vector.load %arg3[%c64, %c0_2] : memref<80x31xf32, #tpu.memory_space<vmem>>, vector<2x31xf32>
    %c72 = arith.constant 72 : index
    %c0_3 = arith.constant 0 : index
    %3 = vector.load %arg3[%c72, %c0_3] : memref<80x31xf32, #tpu.memory_space<vmem>>, vector<2x31xf32>
    %c0_4 = arith.constant 0 : index
    %c0_5 = arith.constant 0 : index
    %4 = vector.load %arg1[%c0_4, %c0_5] : memref<1664x128xf32, #tpu.memory_space<vmem>>, vector<64x32xf32>
    %c0_6 = arith.constant 0 : index
    %c0_7 = arith.constant 0 : index
    %5 = vector.load %arg0[%c0_6, %c0_7] : memref<31x64xf32, #tpu.memory_space<vmem>>, vector<31x64xf32>
    %cst = arith.constant dense<0.000000e+00> : vector<31x32xf32>
    %6 = tpu.matmul %5, %4, %cst {dimension_numbers = #tpu.dot_dimension_numbers<[1], [0], [0], [1], [0, 0, 1, 1], [], []>} : vector<31x64xf32>, vector<64x32xf32>, vector<31x32xf32> -> vector<31x32xf32>
    %7 = tpu.iota {dimensions = array<i32: 0>} : vector<31x32xi32>
    %c14_i32 = arith.constant 14 : i32
    %8 = vector.broadcast %c14_i32 : i32 to vector<31x32xi32>
    %9 = arith.cmpi slt, %7, %8 : vector<31x32xi32>
    %c0_8 = arith.constant 0 : index
    %c0_9 = arith.constant 0 : index
    %10 = vector.load %arg2[%c0_8, %c0_9] : memref<120x128xf32, #tpu.memory_space<vmem>>, vector<1x32xf32>
    %c8 = arith.constant 8 : index
    %c0_10 = arith.constant 0 : index
    %11 = vector.load %arg2[%c8, %c0_10] : memref<120x128xf32, #tpu.memory_space<vmem>>, vector<1x32xf32>
    %12 = vector.shape_cast %10 : vector<1x32xf32> to vector<1x32xf32>
    %13 = vector.broadcast %12 : vector<1x32xf32> to vector<31x32xf32>
    %14 = vector.shape_cast %11 : vector<1x32xf32> to vector<1x32xf32>
    %15 = vector.broadcast %14 : vector<1x32xf32> to vector<31x32xf32>
    %16 = arith.select %9, %13, %15 : vector<31x32xi1>, vector<31x32xf32>
    %17 = arith.addf %6, %16 : vector<31x32xf32>
    %cst_11 = arith.constant 0.000000e+00 : f32
    %18 = vector.broadcast %cst_11 : f32 to vector<31x32xf32>
    %19 = arith.maximumf %17, %18 : vector<31x32xf32>
    %c14_i32_12 = arith.constant 14 : i32
    %20 = vector.broadcast %c14_i32_12 : i32 to vector<31x32xi32>
    %21 = arith.cmpi slt, %7, %20 : vector<31x32xi32>
    %cst_13 = arith.constant 0.000000e+00 : f32
    %22 = vector.broadcast %cst_13 : f32 to vector<31x32xf32>
    %23 = arith.select %21, %19, %22 : vector<31x32xi1>, vector<31x32xf32>
    %c14_i32_14 = arith.constant 14 : i32
    %24 = vector.broadcast %c14_i32_14 : i32 to vector<31x32xi32>
    %25 = arith.cmpi slt, %7, %24 : vector<31x32xi32>
    %cst_15 = arith.constant 0.000000e+00 : f32
    %26 = vector.broadcast %cst_15 : f32 to vector<31x32xf32>
    %27 = arith.select %25, %26, %19 : vector<31x32xi1>, vector<31x32xf32>
    %28 = tpu.concatenate %23, %27 in 1 : vector<31x32xf32>, vector<31x32xf32> -> vector<31x64xf32>
    %c64_16 = arith.constant 64 : index
    %c0_17 = arith.constant 0 : index
    %29 = vector.load %arg1[%c64_16, %c0_17] : memref<1664x128xf32, #tpu.memory_space<vmem>>, vector<64x64xf32>
    %c128 = arith.constant 128 : index
    %c0_18 = arith.constant 0 : index
    %30 = vector.load %arg1[%c128, %c0_18] : memref<1664x128xf32, #tpu.memory_space<vmem>>, vector<128x32xf32>
    %c16 = arith.constant 16 : index
    %c0_19 = arith.constant 0 : index
    %31 = vector.load %arg2[%c16, %c0_19] : memref<120x128xf32, #tpu.memory_space<vmem>>, vector<1x64xf32>
    %c24 = arith.constant 24 : index
    %c0_20 = arith.constant 0 : index
    %32 = vector.load %arg2[%c24, %c0_20] : memref<120x128xf32, #tpu.memory_space<vmem>>, vector<1x32xf32>
    %c32_21 = arith.constant 32 : index
    %c0_22 = arith.constant 0 : index
    %33 = vector.load %arg2[%c32_21, %c0_22] : memref<120x128xf32, #tpu.memory_space<vmem>>, vector<1x32xf32>
    %cst_23 = arith.constant dense<0.000000e+00> : vector<31x64xf32>
    %34 = tpu.matmul %28, %29, %cst_23 {dimension_numbers = #tpu.dot_dimension_numbers<[1], [0], [0], [1], [0, 0, 1, 1], [], []>} : vector<31x64xf32>, vector<64x64xf32>, vector<31x64xf32> -> vector<31x64xf32>
    %cst_24 = arith.constant dense<0.000000e+00> : vector<31x64xf32>
    %35 = tpu.matmul %1, %34, %cst_24 {dimension_numbers = #tpu.dot_dimension_numbers<[1], [0], [0], [1], [0, 0, 1, 1], [], []>} : vector<31x31xf32>, vector<31x64xf32>, vector<31x64xf32> -> vector<31x64xf32>
    %36 = arith.addf %34, %35 : vector<31x64xf32>
    %37 = vector.broadcast %31 : vector<1x64xf32> to vector<31x64xf32>
    %38 = arith.addf %36, %37 : vector<31x64xf32>
    %39 = tpu.iota {dimensions = array<i32: 0>} : vector<31x64xi32>
    %40 = tpu.iota {dimensions = array<i32: 1>} : vector<31x64xi32>
    %c14_i32_25 = arith.constant 14 : i32
    %41 = vector.broadcast %c14_i32_25 : i32 to vector<31x64xi32>
    %42 = arith.cmpi slt, %39, %41 : vector<31x64xi32>
    %c32_i32 = arith.constant 32 : i32
    %43 = vector.broadcast %c32_i32 : i32 to vector<31x64xi32>
    %44 = arith.cmpi slt, %40, %43 : vector<31x64xi32>
    %45 = arith.xori %42, %44 : vector<31x64xi1>
    %cst_26 = arith.constant dense<true> : vector<31x64xi1>
    %46 = arith.xori %45, %cst_26 : vector<31x64xi1>
    %cst_27 = arith.constant 0.000000e+00 : f32
    %47 = vector.broadcast %cst_27 : f32 to vector<31x64xf32>
    %48 = arith.select %46, %38, %47 : vector<31x64xi1>, vector<31x64xf32>
    %cst_28 = arith.constant dense<0.000000e+00> : vector<31x64xf32>
    %49 = tpu.matmul %0, %48, %cst_28 {dimension_numbers = #tpu.dot_dimension_numbers<[1], [0], [0], [1], [0, 0, 1, 1], [], []>} : vector<31x31xf32>, vector<31x64xf32>, vector<31x64xf32> -> vector<31x64xf32>
    %50 = arith.subf %48, %49 : vector<31x64xf32>
    %51 = tpu.concatenate %48, %50 in 1 : vector<31x64xf32>, vector<31x64xf32> -> vector<31x128xf32>
    %52 = tpu.iota {dimensions = array<i32: 0>} : vector<31x32xi32>
    %c14_i32_29 = arith.constant 14 : i32
    %53 = vector.broadcast %c14_i32_29 : i32 to vector<31x32xi32>
    %54 = arith.cmpi slt, %52, %53 : vector<31x32xi32>
    %55 = vector.shape_cast %32 : vector<1x32xf32> to vector<1x32xf32>
    %56 = vector.broadcast %55 : vector<1x32xf32> to vector<31x32xf32>
    %57 = vector.shape_cast %33 : vector<1x32xf32> to vector<1x32xf32>
    %58 = vector.broadcast %57 : vector<1x32xf32> to vector<31x32xf32>
    %59 = arith.select %54, %56, %58 : vector<31x32xi1>, vector<31x32xf32>
    %cst_30 = arith.constant dense<0.000000e+00> : vector<31x32xf32>
    %60 = tpu.matmul %51, %30, %cst_30 {dimension_numbers = #tpu.dot_dimension_numbers<[1], [0], [0], [1], [0, 0, 1, 1], [], []>} : vector<31x128xf32>, vector<128x32xf32>, vector<31x32xf32> -> vector<31x32xf32>
    %61 = arith.addf %60, %59 : vector<31x32xf32>
    %cst_31 = arith.constant 0.000000e+00 : f32
    %62 = vector.broadcast %cst_31 : f32 to vector<31x32xf32>
    %63 = arith.maximumf %61, %62 : vector<31x32xf32>
    %c14_i32_32 = arith.constant 14 : i32
    %64 = vector.broadcast %c14_i32_32 : i32 to vector<31x32xi32>
    %65 = arith.cmpi slt, %52, %64 : vector<31x32xi32>
    %cst_33 = arith.constant 0.000000e+00 : f32
    %66 = vector.broadcast %cst_33 : f32 to vector<31x32xf32>
    %67 = arith.select %65, %63, %66 : vector<31x32xi1>, vector<31x32xf32>
    %c14_i32_34 = arith.constant 14 : i32
    %68 = vector.broadcast %c14_i32_34 : i32 to vector<31x32xi32>
    %69 = arith.cmpi slt, %52, %68 : vector<31x32xi32>
    %cst_35 = arith.constant 0.000000e+00 : f32
    %70 = vector.broadcast %cst_35 : f32 to vector<31x32xf32>
    %71 = arith.select %69, %70, %63 : vector<31x32xi1>, vector<31x32xf32>
    %72 = tpu.concatenate %67, %71 in 1 : vector<31x32xf32>, vector<31x32xf32> -> vector<31x64xf32>
    %73 = tpu.concatenate %28, %72 in 1 : vector<31x64xf32>, vector<31x64xf32> -> vector<31x128xf32>
    %c256 = arith.constant 256 : index
    %c0_36 = arith.constant 0 : index
    %74 = vector.load %arg1[%c256, %c0_36] : memref<1664x128xf32, #tpu.memory_space<vmem>>, vector<128x64xf32>
    %c384 = arith.constant 384 : index
    %c0_37 = arith.constant 0 : index
    %75 = vector.load %arg1[%c384, %c0_37] : memref<1664x128xf32, #tpu.memory_space<vmem>>, vector<128x32xf32>
    %c40 = arith.constant 40 : index
    %c0_38 = arith.constant 0 : index
    %76 = vector.load %arg2[%c40, %c0_38] : memref<120x128xf32, #tpu.memory_space<vmem>>, vector<1x64xf32>
    %c48 = arith.constant 48 : index
    %c0_39 = arith.constant 0 : index
    %77 = vector.load %arg2[%c48, %c0_39] : memref<120x128xf32, #tpu.memory_space<vmem>>, vector<1x32xf32>
    %c56 = arith.constant 56 : index
    %c0_40 = arith.constant 0 : index
    %78 = vector.load %arg2[%c56, %c0_40] : memref<120x128xf32, #tpu.memory_space<vmem>>, vector<1x32xf32>
    %cst_41 = arith.constant dense<0.000000e+00> : vector<31x64xf32>
    %79 = tpu.matmul %73, %74, %cst_41 {dimension_numbers = #tpu.dot_dimension_numbers<[1], [0], [0], [1], [0, 0, 1, 1], [], []>} : vector<31x128xf32>, vector<128x64xf32>, vector<31x64xf32> -> vector<31x64xf32>
    %cst_42 = arith.constant dense<0.000000e+00> : vector<31x64xf32>
    %80 = tpu.matmul %1, %79, %cst_42 {dimension_numbers = #tpu.dot_dimension_numbers<[1], [0], [0], [1], [0, 0, 1, 1], [], []>} : vector<31x31xf32>, vector<31x64xf32>, vector<31x64xf32> -> vector<31x64xf32>
    %81 = arith.addf %79, %80 : vector<31x64xf32>
    %82 = vector.broadcast %76 : vector<1x64xf32> to vector<31x64xf32>
    %83 = arith.addf %81, %82 : vector<31x64xf32>
    %84 = tpu.iota {dimensions = array<i32: 0>} : vector<31x64xi32>
    %85 = tpu.iota {dimensions = array<i32: 1>} : vector<31x64xi32>
    %c14_i32_43 = arith.constant 14 : i32
    %86 = vector.broadcast %c14_i32_43 : i32 to vector<31x64xi32>
    %87 = arith.cmpi slt, %84, %86 : vector<31x64xi32>
    %c32_i32_44 = arith.constant 32 : i32
    %88 = vector.broadcast %c32_i32_44 : i32 to vector<31x64xi32>
    %89 = arith.cmpi slt, %85, %88 : vector<31x64xi32>
    %90 = arith.xori %87, %89 : vector<31x64xi1>
    %cst_45 = arith.constant dense<true> : vector<31x64xi1>
    %91 = arith.xori %90, %cst_45 : vector<31x64xi1>
    %cst_46 = arith.constant 0.000000e+00 : f32
    %92 = vector.broadcast %cst_46 : f32 to vector<31x64xf32>
    %93 = arith.select %91, %83, %92 : vector<31x64xi1>, vector<31x64xf32>
    %cst_47 = arith.constant dense<0.000000e+00> : vector<31x64xf32>
    %94 = tpu.matmul %0, %93, %cst_47 {dimension_numbers = #tpu.dot_dimension_numbers<[1], [0], [0], [1], [0, 0, 1, 1], [], []>} : vector<31x31xf32>, vector<31x64xf32>, vector<31x64xf32> -> vector<31x64xf32>
    %95 = arith.subf %93, %94 : vector<31x64xf32>
    %96 = tpu.concatenate %93, %95 in 1 : vector<31x64xf32>, vector<31x64xf32> -> vector<31x128xf32>
    %97 = tpu.iota {dimensions = array<i32: 0>} : vector<31x32xi32>
    %c14_i32_48 = arith.constant 14 : i32
    %98 = vector.broadcast %c14_i32_48 : i32 to vector<31x32xi32>
    %99 = arith.cmpi slt, %97, %98 : vector<31x32xi32>
    %100 = vector.shape_cast %77 : vector<1x32xf32> to vector<1x32xf32>
    %101 = vector.broadcast %100 : vector<1x32xf32> to vector<31x32xf32>
    %102 = vector.shape_cast %78 : vector<1x32xf32> to vector<1x32xf32>
    %103 = vector.broadcast %102 : vector<1x32xf32> to vector<31x32xf32>
    %104 = arith.select %99, %101, %103 : vector<31x32xi1>, vector<31x32xf32>
    %cst_49 = arith.constant dense<0.000000e+00> : vector<31x32xf32>
    %105 = tpu.matmul %96, %75, %cst_49 {dimension_numbers = #tpu.dot_dimension_numbers<[1], [0], [0], [1], [0, 0, 1, 1], [], []>} : vector<31x128xf32>, vector<128x32xf32>, vector<31x32xf32> -> vector<31x32xf32>
    %106 = arith.addf %105, %104 : vector<31x32xf32>
    %cst_50 = arith.constant 0.000000e+00 : f32
    %107 = vector.broadcast %cst_50 : f32 to vector<31x32xf32>
    %108 = arith.maximumf %106, %107 : vector<31x32xf32>
    %c14_i32_51 = arith.constant 14 : i32
    %109 = vector.broadcast %c14_i32_51 : i32 to vector<31x32xi32>
    %110 = arith.cmpi slt, %97, %109 : vector<31x32xi32>
    %cst_52 = arith.constant 0.000000e+00 : f32
    %111 = vector.broadcast %cst_52 : f32 to vector<31x32xf32>
    %112 = arith.select %110, %108, %111 : vector<31x32xi1>, vector<31x32xf32>
    %c14_i32_53 = arith.constant 14 : i32
    %113 = vector.broadcast %c14_i32_53 : i32 to vector<31x32xi32>
    %114 = arith.cmpi slt, %97, %113 : vector<31x32xi32>
    %cst_54 = arith.constant 0.000000e+00 : f32
    %115 = vector.broadcast %cst_54 : f32 to vector<31x32xf32>
    %116 = arith.select %114, %115, %108 : vector<31x32xi1>, vector<31x32xf32>
    %117 = tpu.concatenate %112, %116 in 1 : vector<31x32xf32>, vector<31x32xf32> -> vector<31x64xf32>
    %118 = tpu.concatenate %73, %117 in 1 : vector<31x128xf32>, vector<31x64xf32> -> vector<31x192xf32>
    %c512 = arith.constant 512 : index
    %c0_55 = arith.constant 0 : index
    %119 = vector.load %arg1[%c512, %c0_55] : memref<1664x128xf32, #tpu.memory_space<vmem>>, vector<192x128xf32>
    %c704 = arith.constant 704 : index
    %c0_56 = arith.constant 0 : index
    %120 = vector.load %arg1[%c704, %c0_56] : memref<1664x128xf32, #tpu.memory_space<vmem>>, vector<256x64xf32>
    %c64_57 = arith.constant 64 : index
    %c0_58 = arith.constant 0 : index
    %121 = vector.load %arg2[%c64_57, %c0_58] : memref<120x128xf32, #tpu.memory_space<vmem>>, vector<1x128xf32>
    %c72_59 = arith.constant 72 : index
    %c0_60 = arith.constant 0 : index
    %122 = vector.load %arg2[%c72_59, %c0_60] : memref<120x128xf32, #tpu.memory_space<vmem>>, vector<1x64xf32>
    %c80 = arith.constant 80 : index
    %c0_61 = arith.constant 0 : index
    %123 = vector.load %arg2[%c80, %c0_61] : memref<120x128xf32, #tpu.memory_space<vmem>>, vector<1x64xf32>
    %cst_62 = arith.constant dense<0.000000e+00> : vector<31x128xf32>
    %124 = tpu.matmul %118, %119, %cst_62 {dimension_numbers = #tpu.dot_dimension_numbers<[1], [0], [0], [1], [0, 0, 1, 1], [], []>} : vector<31x192xf32>, vector<192x128xf32>, vector<31x128xf32> -> vector<31x128xf32>
    %cst_63 = arith.constant dense<0.000000e+00> : vector<31x128xf32>
    %125 = tpu.matmul %1, %124, %cst_63 {dimension_numbers = #tpu.dot_dimension_numbers<[1], [0], [0], [1], [0, 0, 1, 1], [], []>} : vector<31x31xf32>, vector<31x128xf32>, vector<31x128xf32> -> vector<31x128xf32>
    %126 = arith.addf %124, %125 : vector<31x128xf32>
    %127 = vector.broadcast %121 : vector<1x128xf32> to vector<31x128xf32>
    %128 = arith.addf %126, %127 : vector<31x128xf32>
    %129 = tpu.iota {dimensions = array<i32: 0>} : vector<31x128xi32>
    %130 = tpu.iota {dimensions = array<i32: 1>} : vector<31x128xi32>
    %c14_i32_64 = arith.constant 14 : i32
    %131 = vector.broadcast %c14_i32_64 : i32 to vector<31x128xi32>
    %132 = arith.cmpi slt, %129, %131 : vector<31x128xi32>
    %c64_i32 = arith.constant 64 : i32
    %133 = vector.broadcast %c64_i32 : i32 to vector<31x128xi32>
    %134 = arith.cmpi slt, %130, %133 : vector<31x128xi32>
    %135 = arith.xori %132, %134 : vector<31x128xi1>
    %cst_65 = arith.constant dense<true> : vector<31x128xi1>
    %136 = arith.xori %135, %cst_65 : vector<31x128xi1>
    %cst_66 = arith.constant 0.000000e+00 : f32
    %137 = vector.broadcast %cst_66 : f32 to vector<31x128xf32>
    %138 = arith.select %136, %128, %137 : vector<31x128xi1>, vector<31x128xf32>
    %cst_67 = arith.constant dense<0.000000e+00> : vector<31x128xf32>
    %139 = tpu.matmul %0, %138, %cst_67 {dimension_numbers = #tpu.dot_dimension_numbers<[1], [0], [0], [1], [0, 0, 1, 1], [], []>} : vector<31x31xf32>, vector<31x128xf32>, vector<31x128xf32> -> vector<31x128xf32>
    %140 = arith.subf %138, %139 : vector<31x128xf32>
    %141 = tpu.concatenate %138, %140 in 1 : vector<31x128xf32>, vector<31x128xf32> -> vector<31x256xf32>
    %142 = tpu.iota {dimensions = array<i32: 0>} : vector<31x64xi32>
    %c14_i32_68 = arith.constant 14 : i32
    %143 = vector.broadcast %c14_i32_68 : i32 to vector<31x64xi32>
    %144 = arith.cmpi slt, %142, %143 : vector<31x64xi32>
    %145 = vector.shape_cast %122 : vector<1x64xf32> to vector<1x64xf32>
    %146 = vector.broadcast %145 : vector<1x64xf32> to vector<31x64xf32>
    %147 = vector.shape_cast %123 : vector<1x64xf32> to vector<1x64xf32>
    %148 = vector.broadcast %147 : vector<1x64xf32> to vector<31x64xf32>
    %149 = arith.select %144, %146, %148 : vector<31x64xi1>, vector<31x64xf32>
    %cst_69 = arith.constant dense<0.000000e+00> : vector<31x64xf32>
    %150 = tpu.matmul %141, %120, %cst_69 {dimension_numbers = #tpu.dot_dimension_numbers<[1], [0], [0], [1], [0, 0, 1, 1], [], []>} : vector<31x256xf32>, vector<256x64xf32>, vector<31x64xf32> -> vector<31x64xf32>
    %151 = arith.addf %150, %149 : vector<31x64xf32>
    %cst_70 = arith.constant 0.000000e+00 : f32
    %152 = vector.broadcast %cst_70 : f32 to vector<31x64xf32>
    %153 = arith.maximumf %151, %152 : vector<31x64xf32>
    %c14_i32_71 = arith.constant 14 : i32
    %154 = vector.broadcast %c14_i32_71 : i32 to vector<31x64xi32>
    %155 = arith.cmpi slt, %142, %154 : vector<31x64xi32>
    %cst_72 = arith.constant 0.000000e+00 : f32
    %156 = vector.broadcast %cst_72 : f32 to vector<31x64xf32>
    %157 = arith.select %155, %153, %156 : vector<31x64xi1>, vector<31x64xf32>
    %c14_i32_73 = arith.constant 14 : i32
    %158 = vector.broadcast %c14_i32_73 : i32 to vector<31x64xi32>
    %159 = arith.cmpi slt, %142, %158 : vector<31x64xi32>
    %cst_74 = arith.constant 0.000000e+00 : f32
    %160 = vector.broadcast %cst_74 : f32 to vector<31x64xf32>
    %161 = arith.select %159, %160, %153 : vector<31x64xi1>, vector<31x64xf32>
    %162 = tpu.concatenate %157, %161 in 1 : vector<31x64xf32>, vector<31x64xf32> -> vector<31x128xf32>
    %163 = tpu.concatenate %118, %162 in 1 : vector<31x192xf32>, vector<31x128xf32> -> vector<31x320xf32>
    %c960 = arith.constant 960 : index
    %c0_75 = arith.constant 0 : index
    %164 = vector.load %arg1[%c960, %c0_75] : memref<1664x128xf32, #tpu.memory_space<vmem>>, vector<320x128xf32>
    %c1280 = arith.constant 1280 : index
    %c0_76 = arith.constant 0 : index
    %165 = vector.load %arg1[%c1280, %c0_76] : memref<1664x128xf32, #tpu.memory_space<vmem>>, vector<256x64xf32>
    %c88 = arith.constant 88 : index
    %c0_77 = arith.constant 0 : index
    %166 = vector.load %arg2[%c88, %c0_77] : memref<120x128xf32, #tpu.memory_space<vmem>>, vector<1x128xf32>
    %c96 = arith.constant 96 : index
    %c0_78 = arith.constant 0 : index
    %167 = vector.load %arg2[%c96, %c0_78] : memref<120x128xf32, #tpu.memory_space<vmem>>, vector<1x64xf32>
    %c104 = arith.constant 104 : index
    %c0_79 = arith.constant 0 : index
    %168 = vector.load %arg2[%c104, %c0_79] : memref<120x128xf32, #tpu.memory_space<vmem>>, vector<1x64xf32>
    %cst_80 = arith.constant dense<0.000000e+00> : vector<31x128xf32>
    %169 = tpu.matmul %163, %164, %cst_80 {dimension_numbers = #tpu.dot_dimension_numbers<[1], [0], [0], [1], [0, 0, 1, 1], [], []>} : vector<31x320xf32>, vector<320x128xf32>, vector<31x128xf32> -> vector<31x128xf32>
    %cst_81 = arith.constant dense<0.000000e+00> : vector<31x128xf32>
    %170 = tpu.matmul %1, %169, %cst_81 {dimension_numbers = #tpu.dot_dimension_numbers<[1], [0], [0], [1], [0, 0, 1, 1], [], []>} : vector<31x31xf32>, vector<31x128xf32>, vector<31x128xf32> -> vector<31x128xf32>
    %171 = arith.addf %169, %170 : vector<31x128xf32>
    %172 = vector.broadcast %166 : vector<1x128xf32> to vector<31x128xf32>
    %173 = arith.addf %171, %172 : vector<31x128xf32>
    %174 = tpu.iota {dimensions = array<i32: 0>} : vector<31x128xi32>
    %175 = tpu.iota {dimensions = array<i32: 1>} : vector<31x128xi32>
    %c14_i32_82 = arith.constant 14 : i32
    %176 = vector.broadcast %c14_i32_82 : i32 to vector<31x128xi32>
    %177 = arith.cmpi slt, %174, %176 : vector<31x128xi32>
    %c64_i32_83 = arith.constant 64 : i32
    %178 = vector.broadcast %c64_i32_83 : i32 to vector<31x128xi32>
    %179 = arith.cmpi slt, %175, %178 : vector<31x128xi32>
    %180 = arith.xori %177, %179 : vector<31x128xi1>
    %cst_84 = arith.constant dense<true> : vector<31x128xi1>
    %181 = arith.xori %180, %cst_84 : vector<31x128xi1>
    %cst_85 = arith.constant 0.000000e+00 : f32
    %182 = vector.broadcast %cst_85 : f32 to vector<31x128xf32>
    %183 = arith.select %181, %173, %182 : vector<31x128xi1>, vector<31x128xf32>
    %cst_86 = arith.constant dense<0.000000e+00> : vector<31x128xf32>
    %184 = tpu.matmul %0, %183, %cst_86 {dimension_numbers = #tpu.dot_dimension_numbers<[1], [0], [0], [1], [0, 0, 1, 1], [], []>} : vector<31x31xf32>, vector<31x128xf32>, vector<31x128xf32> -> vector<31x128xf32>
    %185 = arith.subf %183, %184 : vector<31x128xf32>
    %186 = tpu.concatenate %183, %185 in 1 : vector<31x128xf32>, vector<31x128xf32> -> vector<31x256xf32>
    %187 = tpu.iota {dimensions = array<i32: 0>} : vector<31x64xi32>
    %c14_i32_87 = arith.constant 14 : i32
    %188 = vector.broadcast %c14_i32_87 : i32 to vector<31x64xi32>
    %189 = arith.cmpi slt, %187, %188 : vector<31x64xi32>
    %190 = vector.shape_cast %167 : vector<1x64xf32> to vector<1x64xf32>
    %191 = vector.broadcast %190 : vector<1x64xf32> to vector<31x64xf32>
    %192 = vector.shape_cast %168 : vector<1x64xf32> to vector<1x64xf32>
    %193 = vector.broadcast %192 : vector<1x64xf32> to vector<31x64xf32>
    %194 = arith.select %189, %191, %193 : vector<31x64xi1>, vector<31x64xf32>
    %cst_88 = arith.constant dense<0.000000e+00> : vector<31x64xf32>
    %195 = tpu.matmul %186, %165, %cst_88 {dimension_numbers = #tpu.dot_dimension_numbers<[1], [0], [0], [1], [0, 0, 1, 1], [], []>} : vector<31x256xf32>, vector<256x64xf32>, vector<31x64xf32> -> vector<31x64xf32>
    %196 = arith.addf %195, %194 : vector<31x64xf32>
    %cst_89 = arith.constant 0.000000e+00 : f32
    %197 = vector.broadcast %cst_89 : f32 to vector<31x64xf32>
    %198 = arith.maximumf %196, %197 : vector<31x64xf32>
    %cst_90 = arith.constant dense<0.000000e+00> : vector<2x64xf32>
    %199 = tpu.matmul %2, %198, %cst_90 {dimension_numbers = #tpu.dot_dimension_numbers<[1], [0], [0], [1], [0, 0, 1, 1], [], []>} : vector<2x31xf32>, vector<31x64xf32>, vector<2x64xf32> -> vector<2x64xf32>
    %cst_91 = arith.constant dense<0.000000e+00> : vector<2x64xf32>
    %200 = tpu.matmul %3, %198, %cst_91 {dimension_numbers = #tpu.dot_dimension_numbers<[1], [0], [0], [1], [0, 0, 1, 1], [], []>} : vector<2x31xf32>, vector<31x64xf32>, vector<2x64xf32> -> vector<2x64xf32>
    %201 = tpu.concatenate %199, %200 in 1 : vector<2x64xf32>, vector<2x64xf32> -> vector<2x128xf32>
    %c1536 = arith.constant 1536 : index
    %c0_92 = arith.constant 0 : index
    %202 = vector.load %arg1[%c1536, %c0_92] : memref<1664x128xf32, #tpu.memory_space<vmem>>, vector<128x1xf32>
    %c112 = arith.constant 112 : index
    %c0_93 = arith.constant 0 : index
    %203 = vector.load %arg2[%c112, %c0_93] : memref<120x128xf32, #tpu.memory_space<vmem>>, vector<1x1xf32>
    %cst_94 = arith.constant dense<0.000000e+00> : vector<2x1xf32>
    %204 = tpu.matmul %201, %202, %cst_94 {dimension_numbers = #tpu.dot_dimension_numbers<[1], [0], [0], [1], [0, 0, 1, 1], [], []>} : vector<2x128xf32>, vector<128x1xf32>, vector<2x1xf32> -> vector<2x1xf32>
    %205 = vector.broadcast %203 : vector<1x1xf32> to vector<2x1xf32>
    %206 = arith.addf %204, %205 : vector<2x1xf32>
    %c0_95 = arith.constant 0 : index
    %c0_96 = arith.constant 0 : index
    %207 = vector.load %arg4[%c0_95, %c0_96] : memref<2x1xf32, #tpu.memory_space<vmem>>, vector<2x1xf32>
    tpu.vector_store %arg4[%c0_95, %c0_96], %206 {strides = array<i32>} : memref<2x1xf32, #tpu.memory_space<vmem>>, vector<2x1xf32>,
    return
  }
}

</mosaic_0001>

<llo_original>
// kernel: fwd.1
$region0: #{fwd.1}
  #allocation0 [shape = 'u32[]', space=smem, size = 0x4, offset = 0x4, fixed_abs, tag = 'smem constant byte address 0x4 - core index']
  #allocation1 [shape = 'u32[72,128]{1,0:T(1,128)}', space=vmem, size = 0x9000, scoped, tag = 'internal scratch']
  %s0 = inlined_call_operand.vmem [shape: f32[31,64], index: 0, kind: input, shape index: {}]
  %s1 = inlined_call_operand.hbm [shape: f32[1664,128], index: 1, kind: input, shape index: {}]
  %s2 = inlined_call_operand.hbm [shape: f32[120,128], index: 2, kind: input, shape index: {}]
  %s3 = inlined_call_operand.vmem [shape: f32[80,31], index: 3, kind: input, shape index: {}]
  %s4 = inlined_call_operand.vmem [shape: f32[2,1], index: 4, kind: output, shape index: {}]
  %s5 = sld [smem:[#allocation0]]
  $region34: #{fwd.1} parent=0
    _
  %s7 = ssub.s32 1, %s5
  %s8 = scalar_select 0, %s7, %s5
  $region1: #{fwd.1} parent=0
    #allocation2 [shape = 'u8[851968]{0}', space=vmem, size = 0xd0000, scoped, tag = 'input window, operand 1, single buffered']
    #allocation3 [shape = 's32[1]{0}', space=sflag, size = 0x4, scoped, tag = 'scoped memory for fwd.1']
    #allocation4 [shape = 'u8[61440]{0}', space=vmem, size = 0xf000, scoped, tag = 'input window, operand 2, single buffered']
    #allocation5 [shape = 's32[1]{0}', space=sflag, size = 0x4, scoped, tag = 'scoped memory for fwd.1']
    %9 = vsyncpa [#allocation3], 0
    %10 = vsyncpa [#allocation5], 0
    // Predicated region
    $region2: #{fwd.1} parent=1 // pred_check
      _
    $region3: #{fwd.1} parent=1 // pred_check_branch
      %12 = sbr.rel (0) target = $region5
    $region4: #{fwd.1} parent=1 // pred_region
      _
    $region5: #{fwd.1} parent=1 // pred_fallthru
      _
    // Predicated region
    $region6: #{fwd.1} parent=1 // pred_check
      _
    $region7: #{fwd.1} parent=1 // pred_check_branch
      %14 = sbr.rel (0) target = $region9
    $region8: #{fwd.1} parent=1 // pred_region
      %16 = vsyncadd [#allocation3], 0
      %s17 = sshll.u32 %s1, 4
      %s18 = int_to_ptr.hbm [resolvable:$true] %s17
      %s19 = sshll.u32 [#allocation2], 4
      %s20 = int_to_ptr.vmem [resolvable:$true] %s19
      %25 = dma.hbm_to_vmem [thread:$0]  %s18, 26624, %s20, [#allocation3], 128, 128, 8
    $region9: #{fwd.1} parent=1 // pred_fallthru
      _
    // Predicated region
    $region10: #{fwd.1} parent=1 // pred_check
      _
    $region11: #{fwd.1} parent=1 // pred_check_branch
      %27 = sbr.rel (0) target = $region13
    $region12: #{fwd.1} parent=1 // pred_region
      %29 = vsyncadd [#allocation5], 0
      %s30 = sshll.u32 %s2, 4
      %s31 = int_to_ptr.hbm [resolvable:$true] %s30
      %s32 = sshll.u32 [#allocation4], 4
      %s33 = int_to_ptr.vmem [resolvable:$true] %s32
      %38 = dma.hbm_to_vmem [thread:$0]  %s31, 1920, %s33, [#allocation5], 128, 128, 8
    $region13: #{fwd.1} parent=1 // pred_fallthru
      _
    // Predicated region
    $region14: #{fwd.1} parent=1 // pred_check
      _
    $region15: #{fwd.1} parent=1 // pred_check_branch
      %40 = sbr.rel (0) target = $region17
    $region16: #{fwd.1} parent=1 // pred_region
      _
    $region17: #{fwd.1} parent=1 // pred_fallthru
      _
    // Predicated region
    $region18: #{fwd.1} parent=1 // pred_check
      _
    $region19: #{fwd.1} parent=1 // pred_check_branch
      %42 = sbr.rel (0) target = $region21
    $region20: #{fwd.1} parent=1 // pred_region
      %44 = dma.done [#allocation3], 26624
    $region21: #{fwd.1} parent=1 // pred_fallthru
      _
    // Predicated region
    $region22: #{fwd.1} parent=1 // pred_check
      _
    $region23: #{fwd.1} parent=1 // pred_check_branch
      %46 = sbr.rel (0) target = $region25
    $region24: #{fwd.1} parent=1 // pred_region
      %48 = dma.done [#allocation5], 1920
    $region25: #{fwd.1} parent=1 // pred_fallthru
      _
    %v49 = vld [vmem:[%s3] sm:$0xff]
    %v50 = vld [vmem:[%s3 + $0x8] sm:$0xff]
    %v51 = vld [vmem:[%s3 + $0x10] sm:$0xff]
    %v52 = vld [vmem:[%s3 + $0x18] sm:$0x7f]
    %v53 = vld [vmem:[%s3 + $0x20] sm:$0xff]
    %v54 = vld [vmem:[%s3 + $0x28] sm:$0xff]
    %v55 = vld [vmem:[%s3 + $0x30] sm:$0xff]
    %v56 = vld [vmem:[%s3 + $0x38] sm:$0x7f]
    %v57 = vld [vmem:[%s3 + $0x40] sm:$0x3]
    %v58 = vld [vmem:[%s3 + $0x48] sm:$0x3]
    %v59 = vld [vmem:[#allocation2] sm:$0xff]
    %v60 = vld [vmem:[#allocation2 + $0x8] sm:$0xff]
    %v61 = vld [vmem:[#allocation2 + $0x10] sm:$0xff]
    %v62 = vld [vmem:[#allocation2 + $0x18] sm:$0xff]
    %v63 = vld [vmem:[#allocation2 + $0x20] sm:$0xff]
    %v64 = vld [vmem:[#allocation2 + $0x28] sm:$0xff]
    %v65 = vld [vmem:[#allocation2 + $0x30] sm:$0xff]
    %v66 = vld [vmem:[#allocation2 + $0x38] sm:$0xff]
    %v67 = vld [vmem:[%s0] sm:$0xff]
    %v68 = vld [vmem:[%s0 + $0x8] sm:$0xff]
    %v69 = vld [vmem:[%s0 + $0x10] sm:$0xff]
    %v70 = vld [vmem:[%s0 + $0x18] sm:$0x7f]
    %v71 = vlaneseq
    %v72 = vshrl.u32 %v71, 7
    %v73 = vadd.s32 %v72, 8
    %v74 = vadd.s32 %v72, 16
    %v75 = vadd.s32 %v72, 24
    %vm76 = vcmp.lt.s32.totalorder %v72, 14
    %vm77 = vcmp.lt.s32.totalorder %v73, 14
    %vm78 = vcmp.lt.s32.totalorder %v74, 14
    %vm79 = vcmp.lt.s32.totalorder %v75, 14
    %v80 = vld [vmem:[#allocation4] sm:$0x1]
    %v81 = vld [vmem:[#allocation4 + $0x8] sm:$0x1]
    %v82 = vperm.slane %v80, 0
    %v83 = vperm.slane %v81, 0
    %v84 = vsel %vm76, %v82, %v83
    %v85 = vsel %vm77, %v82, %v83
    %v86 = vsel %vm78, %v82, %v83
    %v87 = vsel %vm79, %v82, %v83
    %vm88 = vcmask 523264
    %v90 = vsel %vm88, %v67, 0
    %v93 = vsel %vm88, %v68, 0
    %v96 = vsel %vm88, %v69, 0
    %v99 = vsel %vm88, %v70, 0
    %101 = vmatpush.msra.mxu0 0.0
    %102 = vmatpush.msra.mxu0 0.0
    %103 = vmatpush.msra.mxu0 0.0
    %104 = vmatpush.msra.mxu0 0.0
    %105 = vmatpush.msra.mxu0 0.0
    %106 = vmatpush.msra.mxu0 0.0
    %107 = vmatpush.msra.mxu0 0.0
    %108 = vmatpush.msra.mxu0 0.0
    %109 = vmatpush.msra.mxu0 %v66
    %110 = vmatpush.msra.mxu0 %v65
    %111 = vmatpush.msra.mxu0 %v64
    %112 = vmatpush.msra.mxu0 %v63
    %113 = vmatpush.msra.mxu0 %v62
    %114 = vmatpush.msra.mxu0 %v61
    %115 = vmatpush.msra.mxu0 %v60
    %116 = vmatpush.msra.mxu0 %v59
    %117 = vmatmul.f32.gmra.mxu0 %v90
    %v118 = vpop.f32.mrf.mxu0
    %v119 = vadd.f32 %v84, %v118
    %120 = vmatmul.f32.gmra.mxu0 %v93
    %v121 = vpop.f32.mrf.mxu0
    %v122 = vadd.f32 %v85, %v121
    %123 = vmatmul.f32.gmra.mxu0 %v96
    %v124 = vpop.f32.mrf.mxu0
    %v125 = vadd.f32 %v86, %v124
    %126 = vmatmul.f32.gmra.mxu0 %v99
    %v127 = vpop.f32.mrf.mxu0
    %v128 = vadd.f32 %v87, %v127
    %129 = vdwg.mxu0
    %v130 = vmax.f32 %v119, 0.0
    %v131 = vmax.f32 %v122, 0.0
    %v132 = vmax.f32 %v125, 0.0
    %v133 = vmax.f32 %v128, 0.0
    %v134 = vsel %vm76, %v130, 0.0
    %v135 = vsel %vm77, %v131, 0.0
    %v136 = vsel %vm78, %v132, 0.0
    %v137 = vsel %vm79, %v133, 0.0
    %v138 = vsel %vm76, 0.0, %v130
    %v139 = vsel %vm77, 0.0, %v131
    %v140 = vsel %vm78, 0.0, %v132
    %v141 = vsel %vm79, 0.0, %v133
    %146 = vrot.lane.b32.xlu0 %v138, 32
    %v147 = vpop.permute.xlu0 %146
    %148 = vrot.lane.b32.xlu0 %v139, 32
    %v149 = vpop.permute.xlu0 %148
    %150 = vrot.lane.b32.xlu0 %v140, 32
    %v151 = vpop.permute.xlu0 %150
    %152 = vrot.lane.b32.xlu0 %v141, 32
    %v153 = vpop.permute.xlu0 %152
    %vm158 = vcmask 261120
    %v159 = vsel %vm158, %v134, %v147
    %v160 = vsel %vm158, %v135, %v149
    %v161 = vsel %vm158, %v136, %v151
    %v162 = vsel %vm158, %v137, %v153
    %v163 = vld [vmem:[#allocation2 + $0x40] sm:$0xff]
    %v164 = vld [vmem:[#allocation2 + $0x48] sm:$0xff]
    %v165 = vld [vmem:[#allocation2 + $0x50] sm:$0xff]
    %v166 = vld [vmem:[#allocation2 + $0x58] sm:$0xff]
    %v167 = vld [vmem:[#allocation2 + $0x60] sm:$0xff]
    %v168 = vld [vmem:[#allocation2 + $0x68] sm:$0xff]
    %v169 = vld [vmem:[#allocation2 + $0x70] sm:$0xff]
    %v170 = vld [vmem:[#allocation2 + $0x78] sm:$0xff]
    %v171 = vld [vmem:[#allocation2 + $0x80] sm:$0xff]
    %v172 = vld [vmem:[#allocation2 + $0x88] sm:$0xff]
    %v173 = vld [vmem:[#allocation2 + $0x90] sm:$0xff]
    %v174 = vld [vmem:[#allocation2 + $0x98] sm:$0xff]
    %v175 = vld [vmem:[#allocation2 + $0xa0] sm:$0xff]
    %v176 = vld [vmem:[#allocation2 + $0xa8] sm:$0xff]
    %v177 = vld [vmem:[#allocation2 + $0xb0] sm:$0xff]
    %v178 = vld [vmem:[#allocation2 + $0xb8] sm:$0xff]
    %v179 = vld [vmem:[#allocation2 + $0xc0] sm:$0xff]
    %v180 = vld [vmem:[#allocation2 + $0xc8] sm:$0xff]
    %v181 = vld [vmem:[#allocation2 + $0xd0] sm:$0xff]
    %v182 = vld [vmem:[#allocation2 + $0xd8] sm:$0xff]
    %v183 = vld [vmem:[#allocation2 + $0xe0] sm:$0xff]
    %v184 = vld [vmem:[#allocation2 + $0xe8] sm:$0xff]
    %v185 = vld [vmem:[#allocation2 + $0xf0] sm:$0xff]
    %v186 = vld [vmem:[#allocation2 + $0xf8] sm:$0xff]
    %v187 = vld [vmem:[#allocation4 + $0x10] sm:$0x1]
    %v188 = vld [vmem:[#allocation4 + $0x18] sm:$0x1]
    %v189 = vld [vmem:[#allocation4 + $0x20] sm:$0x1]
    %v191 = vsel %vm88, %v159, 0
    %v194 = vsel %vm88, %v160, 0
    %v197 = vsel %vm88, %v161, 0
    %v200 = vsel %vm88, %v162, 0
    %202 = vmatpush.msra.mxu0 0.0
    %203 = vmatpush.msra.mxu0 0.0
    %204 = vmatpush.msra.mxu0 0.0
    %205 = vmatpush.msra.mxu0 0.0
    %206 = vmatpush.msra.mxu0 0.0
    %207 = vmatpush.msra.mxu0 0.0
    %208 = vmatpush.msra.mxu0 0.0
    %209 = vmatpush.msra.mxu0 0.0
    %210 = vmatpush.msra.mxu0 %v170
    %211 = vmatpush.msra.mxu0 %v169
    %212 = vmatpush.msra.mxu0 %v168
    %213 = vmatpush.msra.mxu0 %v167
    %214 = vmatpush.msra.mxu0 %v166
    %215 = vmatpush.msra.mxu0 %v165
    %216 = vmatpush.msra.mxu0 %v164
    %217 = vmatpush.msra.mxu0 %v163
    %218 = vmatmul.f32.gmra.mxu0 %v191
    %v219 = vpop.f32.mrf.mxu0
    %v220 = vadd.f32 0.0, %v219
    %221 = vmatmul.f32.gmra.mxu0 %v194
    %v222 = vpop.f32.mrf.mxu0
    %v223 = vadd.f32 0.0, %v222
    %224 = vmatmul.f32.gmra.mxu0 %v197
    %v225 = vpop.f32.mrf.mxu0
    %v226 = vadd.f32 0.0, %v225
    %227 = vmatmul.f32.gmra.mxu0 %v200
    %v228 = vpop.f32.mrf.mxu0
    %v229 = vadd.f32 0.0, %v228
    %230 = vdwg.mxu0
    %vm231 = vcmask 252928
    %v233 = vsel %vm231, %v53, 0
    %v236 = vsel %vm231, %v54, 0
    %v239 = vsel %vm231, %v55, 0
    %v242 = vsel %vm231, %v56, 0
    %vm244 = vcmask 1046528
    %v246 = vsel %vm244, %v229, 0
    %248 = vmatpush.msra.mxu0 0.0
    %249 = vmatpush.msra.mxu0 0.0
    %250 = vmatpush.msra.mxu0 0.0
    %251 = vmatpush.msra.mxu0 0.0
    %252 = vmatpush.msra.mxu0 0.0
    %253 = vmatpush.msra.mxu0 0.0
    %254 = vmatpush.msra.mxu0 0.0
    %255 = vmatpush.msra.mxu0 0.0
    %256 = vmatpush.msra.mxu0 0.0
    %257 = vmatpush.msra.mxu0 0.0
    %258 = vmatpush.msra.mxu0 0.0
    %259 = vmatpush.msra.mxu0 0.0
    %260 = vmatpush.msra.mxu0 %v246
    %261 = vmatpush.msra.mxu0 %v226
    %262 = vmatpush.msra.mxu0 %v223
    %263 = vmatpush.msra.mxu0 %v220
    %264 = vmatmul.f32.gmra.mxu0 %v233
    %v265 = vpop.f32.mrf.mxu0
    %v266 = vadd.f32 0.0, %v265
    %267 = vmatmul.f32.gmra.mxu0 %v236
    %v268 = vpop.f32.mrf.mxu0
    %v269 = vadd.f32 0.0, %v268
    %270 = vmatmul.f32.gmra.mxu0 %v239
    %v271 = vpop.f32.mrf.mxu0
    %v272 = vadd.f32 0.0, %v271
    %273 = vmatmul.f32.gmra.mxu0 %v242
    %v274 = vpop.f32.mrf.mxu0
    %v275 = vadd.f32 0.0, %v274
    %276 = vdwg.mxu0
    %v277 = vadd.f32 %v220, %v266
    %v278 = vadd.f32 %v223, %v269
    %v279 = vadd.f32 %v226, %v272
    %v280 = vadd.f32 %v229, %v275
    %v281 = vperm.slane %v187, 0
    %v282 = vadd.f32 %v277, %v281
    %v283 = vadd.f32 %v278, %v281
    %v284 = vadd.f32 %v279, %v281
    %v285 = vadd.f32 %v280, %v281
    %v286 = vlaneseq
    %v287 = vand.u32 %v286, 127
    %vm288 = vcmp.lt.s32.totalorder %v287, 32
    %vm289 = vmxor %vm76, %vm288
    %vm290 = vmxor %vm77, %vm288
    %vm291 = vmxor %vm78, %vm288
    %vm292 = vmxor %vm79, %vm288
    %vm293 = vmxor %vm289, 1
    %vm294 = vmxor %vm290, 1
    %vm295 = vmxor %vm291, 1
    %vm296 = vmxor %vm292, 1
    %v297 = vsel %vm293, %v282, 0.0
    %v298 = vsel %vm294, %v283, 0.0
    %v299 = vsel %vm295, %v284, 0.0
    %v300 = vsel %vm296, %v285, 0.0
    %v302 = vsel %vm231, %v49, 0
    %v305 = vsel %vm231, %v50, 0
    %v308 = vsel %vm231, %v51, 0
    %v311 = vsel %vm231, %v52, 0
    %v314 = vsel %vm244, %v300, 0
    %316 = vmatpush.msra.mxu0 0.0
    %317 = vmatpush.msra.mxu0 0.0
    %318 = vmatpush.msra.mxu0 0.0
    %319 = vmatpush.msra.mxu0 0.0
    %320 = vmatpush.msra.mxu0 0.0
    %321 = vmatpush.msra.mxu0 0.0
    %322 = vmatpush.msra.mxu0 0.0
    %323 = vmatpush.msra.mxu0 0.0
    %324 = vmatpush.msra.mxu0 0.0
    %325 = vmatpush.msra.mxu0 0.0
    %326 = vmatpush.msra.mxu0 0.0
    %327 = vmatpush.msra.mxu0 0.0
    %328 = vmatpush.msra.mxu0 %v314
    %329 = vmatpush.msra.mxu0 %v299
    %330 = vmatpush.msra.mxu0 %v298
    %331 = vmatpush.msra.mxu0 %v297
    %332 = vmatmul.f32.gmra.mxu0 %v302
    %v333 = vpop.f32.mrf.mxu0
    %v334 = vadd.f32 0.0, %v333
    %335 = vmatmul.f32.gmra.mxu0 %v305
    %v336 = vpop.f32.mrf.mxu0
    %v337 = vadd.f32 0.0, %v336
    %338 = vmatmul.f32.gmra.mxu0 %v308
    %v339 = vpop.f32.mrf.mxu0
    %v340 = vadd.f32 0.0, %v339
    %341 = vmatmul.f32.gmra.mxu0 %v311
    %v342 = vpop.f32.mrf.mxu0
    %v343 = vadd.f32 0.0, %v342
    %344 = vdwg.mxu0
    %v345 = vsub.f32 %v297, %v334
    %v346 = vsub.f32 %v298, %v337
    %v347 = vsub.f32 %v299, %v340
    %v348 = vsub.f32 %v300, %v343
    %353 = vrot.lane.b32.xlu0 %v345, 64
    %v354 = vpop.permute.xlu0 %353
    %355 = vrot.lane.b32.xlu0 %v346, 64
    %v356 = vpop.permute.xlu0 %355
    %357 = vrot.lane.b32.xlu0 %v347, 64
    %v358 = vpop.permute.xlu0 %357
    %359 = vrot.lane.b32.xlu0 %v348, 64
    %v360 = vpop.permute.xlu0 %359
    %v365 = vsel %vm88, %v297, %v354
    %v366 = vsel %vm88, %v298, %v356
    %v367 = vsel %vm88, %v299, %v358
    %v368 = vsel %vm88, %v300, %v360
    %v369 = vperm.slane %v188, 0
    %v370 = vperm.slane %v189, 0
    %v371 = vsel %vm76, %v369, %v370
    %v372 = vsel %vm77, %v369, %v370
    %v373 = vsel %vm78, %v369, %v370
    %v374 = vsel %vm79, %v369, %v370
    %375 = vmatpush.msra.mxu0 %v186
    %376 = vmatpush.msra.mxu0 %v185
    %377 = vmatpush.msra.mxu0 %v184
    %378 = vmatpush.msra.mxu0 %v183
    %379 = vmatpush.msra.mxu0 %v182
    %380 = vmatpush.msra.mxu0 %v181
    %381 = vmatpush.msra.mxu0 %v180
    %382 = vmatpush.msra.mxu0 %v179
    %383 = vmatpush.msra.mxu0 %v178
    %384 = vmatpush.msra.mxu0 %v177
    %385 = vmatpush.msra.mxu0 %v176
    %386 = vmatpush.msra.mxu0 %v175
    %387 = vmatpush.msra.mxu0 %v174
    %388 = vmatpush.msra.mxu0 %v173
    %389 = vmatpush.msra.mxu0 %v172
    %390 = vmatpush.msra.mxu0 %v171
    %391 = vmatmul.f32.gmra.mxu0 %v365
    %v392 = vpop.f32.mrf.mxu0
    %v393 = vadd.f32 %v371, %v392
    %394 = vmatmul.f32.gmra.mxu0 %v366
    %v395 = vpop.f32.mrf.mxu0
    %v396 = vadd.f32 %v372, %v395
    %397 = vmatmul.f32.gmra.mxu0 %v367
    %v398 = vpop.f32.mrf.mxu0
    %v399 = vadd.f32 %v373, %v398
    %400 = vmatmul.f32.gmra.mxu0 %v368
    %v401 = vpop.f32.mrf.mxu0
    %v402 = vadd.f32 %v374, %v401
    %403 = vdwg.mxu0
    %v404 = vmax.f32 %v393, 0.0
    %v405 = vmax.f32 %v396, 0.0
    %v406 = vmax.f32 %v399, 0.0
    %v407 = vmax.f32 %v402, 0.0
    %v408 = vsel %vm76, %v404, 0.0
    %v409 = vsel %vm77, %v405, 0.0
    %v410 = vsel %vm78, %v406, 0.0
    %v411 = vsel %vm79, %v407, 0.0
    %v412 = vsel %vm76, 0.0, %v404
    %v413 = vsel %vm77, 0.0, %v405
    %v414 = vsel %vm78, 0.0, %v406
    %v415 = vsel %vm79, 0.0, %v407
    %420 = vrot.lane.b32.xlu0 %v412, 32
    %v421 = vpop.permute.xlu0 %420
    %422 = vrot.lane.b32.xlu0 %v413, 32
    %v423 = vpop.permute.xlu0 %422
    %424 = vrot.lane.b32.xlu0 %v414, 32
    %v425 = vpop.permute.xlu0 %424
    %426 = vrot.lane.b32.xlu0 %v415, 32
    %v427 = vpop.permute.xlu0 %426
    %v432 = vsel %vm158, %v408, %v421
    %v433 = vsel %vm158, %v409, %v423
    %v434 = vsel %vm158, %v410, %v425
    %v435 = vsel %vm158, %v411, %v427
    %440 = vrot.lane.b32.xlu0 %v432, 64
    %v441 = vpop.permute.xlu0 %440
    %442 = vrot.lane.b32.xlu0 %v433, 64
    %v443 = vpop.permute.xlu0 %442
    %444 = vrot.lane.b32.xlu0 %v434, 64
    %v445 = vpop.permute.xlu0 %444
    %446 = vrot.lane.b32.xlu0 %v435, 64
    %v447 = vpop.permute.xlu0 %446
    %v452 = vsel %vm88, %v159, %v441
    %v453 = vsel %vm88, %v160, %v443
    %v454 = vsel %vm88, %v161, %v445
    %v455 = vsel %vm88, %v162, %v447
    %v456 = vld [vmem:[#allocation2 + $0x100] sm:$0xff]
    %v457 = vld [vmem:[#allocation2 + $0x108] sm:$0xff]
    %v458 = vld [vmem:[#allocation2 + $0x110] sm:$0xff]
    %v459 = vld [vmem:[#allocation2 + $0x118] sm:$0xff]
    %v460 = vld [vmem:[#allocation2 + $0x120] sm:$0xff]
    %v461 = vld [vmem:[#allocation2 + $0x128] sm:$0xff]
    %v462 = vld [vmem:[#allocation2 + $0x130] sm:$0xff]
    %v463 = vld [vmem:[#allocation2 + $0x138] sm:$0xff]
    %v464 = vld [vmem:[#allocation2 + $0x140] sm:$0xff]
    %v465 = vld [vmem:[#allocation2 + $0x148] sm:$0xff]
    %v466 = vld [vmem:[#allocation2 + $0x150] sm:$0xff]
    %v467 = vld [vmem:[#allocation2 + $0x158] sm:$0xff]
    %v468 = vld [vmem:[#allocation2 + $0x160] sm:$0xff]
    %v469 = vld [vmem:[#allocation2 + $0x168] sm:$0xff]
    %v470 = vld [vmem:[#allocation2 + $0x170] sm:$0xff]
    %v471 = vld [vmem:[#allocation2 + $0x178] sm:$0xff]
    %v472 = vld [vmem:[#allocation2 + $0x180] sm:$0xff]
    %v473 = vld [vmem:[#allocation2 + $0x188] sm:$0xff]
    %v474 = vld [vmem:[#allocation2 + $0x190] sm:$0xff]
    %v475 = vld [vmem:[#allocation2 + $0x198] sm:$0xff]
    %v476 = vld [vmem:[#allocation2 + $0x1a0] sm:$0xff]
    %v477 = vld [vmem:[#allocation2 + $0x1a8] sm:$0xff]
    %v478 = vld [vmem:[#allocation2 + $0x1b0] sm:$0xff]
    %v479 = vld [vmem:[#allocation2 + $0x1b8] sm:$0xff]
    %v480 = vld [vmem:[#allocation2 + $0x1c0] sm:$0xff]
    %v481 = vld [vmem:[#allocation2 + $0x1c8] sm:$0xff]
    %v482 = vld [vmem:[#allocation2 + $0x1d0] sm:$0xff]
    %v483 = vld [vmem:[#allocation2 + $0x1d8] sm:$0xff]
    %v484 = vld [vmem:[#allocation2 + $0x1e0] sm:$0xff]
    %v485 = vld [vmem:[#allocation2 + $0x1e8] sm:$0xff]
    %v486 = vld [vmem:[#allocation2 + $0x1f0] sm:$0xff]
    %v487 = vld [vmem:[#allocation2 + $0x1f8] sm:$0xff]
    %v488 = vld [vmem:[#allocation4 + $0x28] sm:$0x1]
    %v489 = vld [vmem:[#allocation4 + $0x30] sm:$0x1]
    %v490 = vld [vmem:[#allocation4 + $0x38] sm:$0x1]
    %491 = vmatpush.msra.mxu0 %v471
    %492 = vmatpush.msra.mxu0 %v470
    %493 = vmatpush.msra.mxu0 %v469
    %494 = vmatpush.msra.mxu0 %v468
    %495 = vmatpush.msra.mxu0 %v467
    %496 = vmatpush.msra.mxu0 %v466
    %497 = vmatpush.msra.mxu0 %v465
    %498 = vmatpush.msra.mxu0 %v464
    %499 = vmatpush.msra.mxu0 %v463
    %500 = vmatpush.msra.mxu0 %v462
    %501 = vmatpush.msra.mxu0 %v461
    %502 = vmatpush.msra.mxu0 %v460
    %503 = vmatpush.msra.mxu0 %v459
    %504 = vmatpush.msra.mxu0 %v458
    %505 = vmatpush.msra.mxu0 %v457
    %506 = vmatpush.msra.mxu0 %v456
    %507 = vmatmul.f32.gmra.mxu0 %v452
    %v508 = vpop.f32.mrf.mxu0
    %v509 = vadd.f32 0.0, %v508
    %510 = vmatmul.f32.gmra.mxu0 %v453
    %v511 = vpop.f32.mrf.mxu0
    %v512 = vadd.f32 0.0, %v511
    %513 = vmatmul.f32.gmra.mxu0 %v454
    %v514 = vpop.f32.mrf.mxu0
    %v515 = vadd.f32 0.0, %v514
    %516 = vmatmul.f32.gmra.mxu0 %v455
    %v517 = vpop.f32.mrf.mxu0
    %v518 = vadd.f32 0.0, %v517
    %519 = vdwg.mxu0
    %v521 = vsel %vm244, %v518, 0
    %523 = vmatpush.msra.mxu0 0.0
    %524 = vmatpush.msra.mxu0 0.0
    %525 = vmatpush.msra.mxu0 0.0
    %526 = vmatpush.msra.mxu0 0.0
    %527 = vmatpush.msra.mxu0 0.0
    %528 = vmatpush.msra.mxu0 0.0
    %529 = vmatpush.msra.mxu0 0.0
    %530 = vmatpush.msra.mxu0 0.0
    %531 = vmatpush.msra.mxu0 0.0
    %532 = vmatpush.msra.mxu0 0.0
    %533 = vmatpush.msra.mxu0 0.0
    %534 = vmatpush.msra.mxu0 0.0
    %535 = vmatpush.msra.mxu0 %v521
    %536 = vmatpush.msra.mxu0 %v515
    %537 = vmatpush.msra.mxu0 %v512
    %538 = vmatpush.msra.mxu0 %v509
    %539 = vmatmul.f32.gmra.mxu0 %v233
    %v540 = vpop.f32.mrf.mxu0
    %v541 = vadd.f32 0.0, %v540
    %542 = vmatmul.f32.gmra.mxu0 %v236
    %v543 = vpop.f32.mrf.mxu0
    %v544 = vadd.f32 0.0, %v543
    %545 = vmatmul.f32.gmra.mxu0 %v239
    %v546 = vpop.f32.mrf.mxu0
    %v547 = vadd.f32 0.0, %v546
    %548 = vmatmul.f32.gmra.mxu0 %v242
    %v549 = vpop.f32.mrf.mxu0
    %v550 = vadd.f32 0.0, %v549
    %551 = vdwg.mxu0
    %v552 = vadd.f32 %v509, %v541
    %v553 = vadd.f32 %v512, %v544
    %v554 = vadd.f32 %v515, %v547
    %v555 = vadd.f32 %v518, %v550
    %v556 = vperm.slane %v488, 0
    %v557 = vadd.f32 %v552, %v556
    %v558 = vadd.f32 %v553, %v556
    %v559 = vadd.f32 %v554, %v556
    %v560 = vadd.f32 %v555, %v556
    %v561 = vsel %vm293, %v557, 0.0
    %v562 = vsel %vm294, %v558, 0.0
    %v563 = vsel %vm295, %v559, 0.0
    %v564 = vsel %vm296, %v560, 0.0
    %v566 = vsel %vm244, %v564, 0
    %568 = vmatpush.msra.mxu0 0.0
    %569 = vmatpush.msra.mxu0 0.0
    %570 = vmatpush.msra.mxu0 0.0
    %571 = vmatpush.msra.mxu0 0.0
    %572 = vmatpush.msra.mxu0 0.0
    %573 = vmatpush.msra.mxu0 0.0
    %574 = vmatpush.msra.mxu0 0.0
    %575 = vmatpush.msra.mxu0 0.0
    %576 = vmatpush.msra.mxu0 0.0
    %577 = vmatpush.msra.mxu0 0.0
    %578 = vmatpush.msra.mxu0 0.0
    %579 = vmatpush.msra.mxu0 0.0
    %580 = vmatpush.msra.mxu0 %v566
    %581 = vmatpush.msra.mxu0 %v563
    %582 = vmatpush.msra.mxu0 %v562
    %583 = vmatpush.msra.mxu0 %v561
    %584 = vmatmul.f32.gmra.mxu0 %v302
    %v585 = vpop.f32.mrf.mxu0
    %v586 = vadd.f32 0.0, %v585
    %587 = vmatmul.f32.gmra.mxu0 %v305
    %v588 = vpop.f32.mrf.mxu0
    %v589 = vadd.f32 0.0, %v588
    %590 = vmatmul.f32.gmra.mxu0 %v308
    %v591 = vpop.f32.mrf.mxu0
    %v592 = vadd.f32 0.0, %v591
    %593 = vmatmul.f32.gmra.mxu0 %v311
    %v594 = vpop.f32.mrf.mxu0
    %v595 = vadd.f32 0.0, %v594
    %596 = vdwg.mxu0
    %v597 = vsub.f32 %v561, %v586
    %v598 = vsub.f32 %v562, %v589
    %v599 = vsub.f32 %v563, %v592
    %v600 = vsub.f32 %v564, %v595
    %605 = vrot.lane.b32.xlu0 %v597, 64
    %v606 = vpop.permute.xlu0 %605
    %607 = vrot.lane.b32.xlu0 %v598, 64
    %v608 = vpop.permute.xlu0 %607
    %609 = vrot.lane.b32.xlu0 %v599, 64
    %v610 = vpop.permute.xlu0 %609
    %611 = vrot.lane.b32.xlu0 %v600, 64
    %v612 = vpop.permute.xlu0 %611
    %v617 = vsel %vm88, %v561, %v606
    %v618 = vsel %vm88, %v562, %v608
    %v619 = vsel %vm88, %v563, %v610
    %v620 = vsel %vm88, %v564, %v612
    %v621 = vperm.slane %v489, 0
    %v622 = vperm.slane %v490, 0
    %v623 = vsel %vm76, %v621, %v622
    %v624 = vsel %vm77, %v621, %v622
    %v625 = vsel %vm78, %v621, %v622
    %v626 = vsel %vm79, %v621, %v622
    %627 = vmatpush.msra.mxu0 %v487
    %628 = vmatpush.msra.mxu0 %v486
    %629 = vmatpush.msra.mxu0 %v485
    %630 = vmatpush.msra.mxu0 %v484
    %631 = vmatpush.msra.mxu0 %v483
    %632 = vmatpush.msra.mxu0 %v482
    %633 = vmatpush.msra.mxu0 %v481
    %634 = vmatpush.msra.mxu0 %v480
    %635 = vmatpush.msra.mxu0 %v479
    %636 = vmatpush.msra.mxu0 %v478
    %637 = vmatpush.msra.mxu0 %v477
    %638 = vmatpush.msra.mxu0 %v476
    %639 = vmatpush.msra.mxu0 %v475
    %640 = vmatpush.msra.mxu0 %v474
    %641 = vmatpush.msra.mxu0 %v473
    %642 = vmatpush.msra.mxu0 %v472
    %643 = vmatmul.f32.gmra.mxu0 %v617
    %v644 = vpop.f32.mrf.mxu0
    %v645 = vadd.f32 %v623, %v644
    %646 = vmatmul.f32.gmra.mxu0 %v618
    %v647 = vpop.f32.mrf.mxu0
    %v648 = vadd.f32 %v624, %v647
    %649 = vmatmul.f32.gmra.mxu0 %v619
    %v650 = vpop.f32.mrf.mxu0
    %v651 = vadd.f32 %v625, %v650
    %652 = vmatmul.f32.gmra.mxu0 %v620
    %v653 = vpop.f32.mrf.mxu0
    %v654 = vadd.f32 %v626, %v653
    %655 = vdwg.mxu0
    %v656 = vmax.f32 %v645, 0.0
    %v657 = vmax.f32 %v648, 0.0
    %v658 = vmax.f32 %v651, 0.0
    %v659 = vmax.f32 %v654, 0.0
    %v660 = vsel %vm76, %v656, 0.0
    %v661 = vsel %vm77, %v657, 0.0
    %v662 = vsel %vm78, %v658, 0.0
    %v663 = vsel %vm79, %v659, 0.0
    %v664 = vsel %vm76, 0.0, %v656
    %v665 = vsel %vm77, 0.0, %v657
    %v666 = vsel %vm78, 0.0, %v658
    %v667 = vsel %vm79, 0.0, %v659
    %672 = vrot.lane.b32.xlu0 %v664, 32
    %v673 = vpop.permute.xlu0 %672
    %674 = vrot.lane.b32.xlu0 %v665, 32
    %v675 = vpop.permute.xlu0 %674
    %676 = vrot.lane.b32.xlu0 %v666, 32
    %v677 = vpop.permute.xlu0 %676
    %678 = vrot.lane.b32.xlu0 %v667, 32
    %v679 = vpop.permute.xlu0 %678
    %v684 = vsel %vm158, %v660, %v673
    %v685 = vsel %vm158, %v661, %v675
    %v686 = vsel %vm158, %v662, %v677
    %v687 = vsel %vm158, %v663, %v679
    %v688 = vld [vmem:[#allocation2 + $0x200] sm:$0xff]
    %v689 = vld [vmem:[#allocation2 + $0x208] sm:$0xff]
    %v690 = vld [vmem:[#allocation2 + $0x210] sm:$0xff]
    %v691 = vld [vmem:[#allocation2 + $0x218] sm:$0xff]
    %v692 = vld [vmem:[#allocation2 + $0x220] sm:$0xff]
    %v693 = vld [vmem:[#allocation2 + $0x228] sm:$0xff]
    %v694 = vld [vmem:[#allocation2 + $0x230] sm:$0xff]
    %v695 = vld [vmem:[#allocation2 + $0x238] sm:$0xff]
    %v696 = vld [vmem:[#allocation2 + $0x240] sm:$0xff]
    %v697 = vld [vmem:[#allocation2 + $0x248] sm:$0xff]
    %v698 = vld [vmem:[#allocation2 + $0x250] sm:$0xff]
    %v699 = vld [vmem:[#allocation2 + $0x258] sm:$0xff]
    %v700 = vld [vmem:[#allocation2 + $0x260] sm:$0xff]
    %v701 = vld [vmem:[#allocation2 + $0x268] sm:$0xff]
    %v702 = vld [vmem:[#allocation2 + $0x270] sm:$0xff]
    %v703 = vld [vmem:[#allocation2 + $0x278] sm:$0xff]
    %v704 = vld [vmem:[#allocation2 + $0x280] sm:$0xff]
    %v705 = vld [vmem:[#allocation2 + $0x288] sm:$0xff]
    %v706 = vld [vmem:[#allocation2 + $0x290] sm:$0xff]
    %v707 = vld [vmem:[#allocation2 + $0x298] sm:$0xff]
    %v708 = vld [vmem:[#allocation2 + $0x2a0] sm:$0xff]
    %v709 = vld [vmem:[#allocation2 + $0x2a8] sm:$0xff]
    %v710 = vld [vmem:[#allocation2 + $0x2b0] sm:$0xff]
    %v711 = vld [vmem:[#allocation2 + $0x2b8] sm:$0xff]
    %v712 = vld [vmem:[#allocation2 + $0x2c0] sm:$0xff]
    %v713 = vld [vmem:[#allocation2 + $0x2c8] sm:$0xff]
    %v714 = vld [vmem:[#allocation2 + $0x2d0] sm:$0xff]
    %v715 = vld [vmem:[#allocation2 + $0x2d8] sm:$0xff]
    %v716 = vld [vmem:[#allocation2 + $0x2e0] sm:$0xff]
    %v717 = vld [vmem:[#allocation2 + $0x2e8] sm:$0xff]
    %v718 = vld [vmem:[#allocation2 + $0x2f0] sm:$0xff]
    %v719 = vld [vmem:[#allocation2 + $0x2f8] sm:$0xff]
    %v720 = vld [vmem:[#allocation2 + $0x300] sm:$0xff]
    %v721 = vld [vmem:[#allocation2 + $0x308] sm:$0xff]
    %v722 = vld [vmem:[#allocation2 + $0x310] sm:$0xff]
    %v723 = vld [vmem:[#allocation2 + $0x318] sm:$0xff]
    %v724 = vld [vmem:[#allocation2 + $0x320] sm:$0xff]
    %v725 = vld [vmem:[#allocation2 + $0x328] sm:$0xff]
    %v726 = vld [vmem:[#allocation2 + $0x330] sm:$0xff]
    %v727 = vld [vmem:[#allocation2 + $0x338] sm:$0xff]
    %v728 = vld [vmem:[#allocation2 + $0x340] sm:$0xff]
    %v729 = vld [vmem:[#allocation2 + $0x348] sm:$0xff]
    %v730 = vld [vmem:[#allocation2 + $0x350] sm:$0xff]
    %v731 = vld [vmem:[#allocation2 + $0x358] sm:$0xff]
    %v732 = vld [vmem:[#allocation2 + $0x360] sm:$0xff]
    %v733 = vld [vmem:[#allocation2 + $0x368] sm:$0xff]
    %v734 = vld [vmem:[#allocation2 + $0x370] sm:$0xff]
    %v735 = vld [vmem:[#allocation2 + $0x378] sm:$0xff]
    %v736 = vld [vmem:[#allocation2 + $0x380] sm:$0xff]
    %v737 = vld [vmem:[#allocation2 + $0x388] sm:$0xff]
    %v738 = vld [vmem:[#allocation2 + $0x390] sm:$0xff]
    %v739 = vld [vmem:[#allocation2 + $0x398] sm:$0xff]
    %v740 = vld [vmem:[#allocation2 + $0x3a0] sm:$0xff]
    %v741 = vld [vmem:[#allocation2 + $0x3a8] sm:$0xff]
    %v742 = vld [vmem:[#allocation2 + $0x3b0] sm:$0xff]
    %v743 = vld [vmem:[#allocation2 + $0x3b8] sm:$0xff]
    %v744 = vld [vmem:[#allocation4 + $0x40] sm:$0x1]
    %v745 = vld [vmem:[#allocation4 + $0x48] sm:$0x1]
    %v746 = vld [vmem:[#allocation4 + $0x50] sm:$0x1]
    %v748 = vsel %vm88, %v684, 0
    %v751 = vsel %vm88, %v685, 0
    %v754 = vsel %vm88, %v686, 0
    %v757 = vsel %vm88, %v687, 0
    %759 = vmatpush.msra.mxu0 %v703
    %760 = vmatpush.msra.mxu0 %v702
    %761 = vmatpush.msra.mxu0 %v701
    %762 = vmatpush.msra.mxu0 %v700
    %763 = vmatpush.msra.mxu0 %v699
    %764 = vmatpush.msra.mxu0 %v698
    %765 = vmatpush.msra.mxu0 %v697
    %766 = vmatpush.msra.mxu0 %v696
    %767 = vmatpush.msra.mxu0 %v695
    %768 = vmatpush.msra.mxu0 %v694
    %769 = vmatpush.msra.mxu0 %v693
    %770 = vmatpush.msra.mxu0 %v692
    %771 = vmatpush.msra.mxu0 %v691
    %772 = vmatpush.msra.mxu0 %v690
    %773 = vmatpush.msra.mxu0 %v689
    %774 = vmatpush.msra.mxu0 %v688
    %775 = vmatmul.f32.gmra.mxu0 %v452
    %v776 = vpop.f32.mrf.mxu0
    %v777 = vadd.f32 0.0, %v776
    %778 = vmatmul.f32.gmra.mxu0 %v453
    %v779 = vpop.f32.mrf.mxu0
    %v780 = vadd.f32 0.0, %v779
    %781 = vmatmul.f32.gmra.mxu0 %v454
    %v782 = vpop.f32.mrf.mxu0
    %v783 = vadd.f32 0.0, %v782
    %784 = vmatmul.f32.gmra.mxu0 %v455
    %v785 = vpop.f32.mrf.mxu0
    %v786 = vadd.f32 0.0, %v785
    %787 = vdwg.mxu0
    %788 = vmatpush.msra.mxu0 0.0
    %789 = vmatpush.msra.mxu0 0.0
    %790 = vmatpush.msra.mxu0 0.0
    %791 = vmatpush.msra.mxu0 0.0
    %792 = vmatpush.msra.mxu0 0.0
    %793 = vmatpush.msra.mxu0 0.0
    %794 = vmatpush.msra.mxu0 0.0
    %795 = vmatpush.msra.mxu0 0.0
    %796 = vmatpush.msra.mxu0 %v711
    %797 = vmatpush.msra.mxu0 %v710
    %798 = vmatpush.msra.mxu0 %v709
    %799 = vmatpush.msra.mxu0 %v708
    %800 = vmatpush.msra.mxu0 %v707
    %801 = vmatpush.msra.mxu0 %v706
    %802 = vmatpush.msra.mxu0 %v705
    %803 = vmatpush.msra.mxu0 %v704
    %804 = vmatmul.f32.gmra.mxu0 %v748
    %v805 = vpop.f32.mrf.mxu0
    %v806 = vadd.f32 %v777, %v805
    %807 = vmatmul.f32.gmra.mxu0 %v751
    %v808 = vpop.f32.mrf.mxu0
    %v809 = vadd.f32 %v780, %v808
    %810 = vmatmul.f32.gmra.mxu0 %v754
    %v811 = vpop.f32.mrf.mxu0
    %v812 = vadd.f32 %v783, %v811
    %813 = vmatmul.f32.gmra.mxu0 %v757
    %v814 = vpop.f32.mrf.mxu0
    %v815 = vadd.f32 %v786, %v814
    %816 = vdwg.mxu0
    %v818 = vsel %vm244, %v815, 0
    %820 = vmatpush.msra.mxu0 0.0
    %821 = vmatpush.msra.mxu0 0.0
    %822 = vmatpush.msra.mxu0 0.0
    %823 = vmatpush.msra.mxu0 0.0
    %824 = vmatpush.msra.mxu0 0.0
    %825 = vmatpush.msra.mxu0 0.0
    %826 = vmatpush.msra.mxu0 0.0
    %827 = vmatpush.msra.mxu0 0.0
    %828 = vmatpush.msra.mxu0 0.0
    %829 = vmatpush.msra.mxu0 0.0
    %830 = vmatpush.msra.mxu0 0.0
    %831 = vmatpush.msra.mxu0 0.0
    %832 = vmatpush.msra.mxu0 %v818
    %833 = vmatpush.msra.mxu0 %v812
    %834 = vmatpush.msra.mxu0 %v809
    %835 = vmatpush.msra.mxu0 %v806
    %836 = vmatmul.f32.gmra.mxu0 %v233
    %v837 = vpop.f32.mrf.mxu0
    %v838 = vadd.f32 0.0, %v837
    %839 = vmatmul.f32.gmra.mxu0 %v236
    %v840 = vpop.f32.mrf.mxu0
    %v841 = vadd.f32 0.0, %v840
    %842 = vmatmul.f32.gmra.mxu0 %v239
    %v843 = vpop.f32.mrf.mxu0
    %v844 = vadd.f32 0.0, %v843
    %845 = vmatmul.f32.gmra.mxu0 %v242
    %v846 = vpop.f32.mrf.mxu0
    %v847 = vadd.f32 0.0, %v846
    %848 = vdwg.mxu0
    %v849 = vadd.f32 %v806, %v838
    %v850 = vadd.f32 %v809, %v841
    %v851 = vadd.f32 %v812, %v844
    %v852 = vadd.f32 %v815, %v847
    %v853 = vperm.slane %v744, 0
    %v854 = vadd.f32 %v849, %v853
    %v855 = vadd.f32 %v850, %v853
    %v856 = vadd.f32 %v851, %v853
    %v857 = vadd.f32 %v852, %v853
    %vm858 = vcmp.lt.s32.totalorder %v287, 64
    %vm859 = vmxor %vm76, %vm858
    %vm860 = vmxor %vm77, %vm858
    %vm861 = vmxor %vm78, %vm858
    %vm862 = vmxor %vm79, %vm858
    %vm863 = vmxor %vm859, 1
    %vm864 = vmxor %vm860, 1
    %vm865 = vmxor %vm861, 1
    %vm866 = vmxor %vm862, 1
    %v867 = vsel %vm863, %v854, 0.0
    %v868 = vsel %vm864, %v855, 0.0
    %v869 = vsel %vm865, %v856, 0.0
    %v870 = vsel %vm866, %v857, 0.0
    %v872 = vsel %vm244, %v870, 0
    %874 = vmatpush.msra.mxu0 0.0
    %875 = vmatpush.msra.mxu0 0.0
    %876 = vmatpush.msra.mxu0 0.0
    %877 = vmatpush.msra.mxu0 0.0
    %878 = vmatpush.msra.mxu0 0.0
    %879 = vmatpush.msra.mxu0 0.0
    %880 = vmatpush.msra.mxu0 0.0
    %881 = vmatpush.msra.mxu0 0.0
    %882 = vmatpush.msra.mxu0 0.0
    %883 = vmatpush.msra.mxu0 0.0
    %884 = vmatpush.msra.mxu0 0.0
    %885 = vmatpush.msra.mxu0 0.0
    %886 = vmatpush.msra.mxu0 %v872
    %887 = vmatpush.msra.mxu0 %v869
    %888 = vmatpush.msra.mxu0 %v868
    %889 = vmatpush.msra.mxu0 %v867
    %890 = vmatmul.f32.gmra.mxu0 %v302
    %v891 = vpop.f32.mrf.mxu0
    %v892 = vadd.f32 0.0, %v891
    %893 = vmatmul.f32.gmra.mxu0 %v305
    %v894 = vpop.f32.mrf.mxu0
    %v895 = vadd.f32 0.0, %v894
    %896 = vmatmul.f32.gmra.mxu0 %v308
    %v897 = vpop.f32.mrf.mxu0
    %v898 = vadd.f32 0.0, %v897
    %899 = vmatmul.f32.gmra.mxu0 %v311
    %v900 = vpop.f32.mrf.mxu0
    %v901 = vadd.f32 0.0, %v900
    %902 = vdwg.mxu0
    %v903 = vsub.f32 %v867, %v892
    %v904 = vsub.f32 %v868, %v895
    %v905 = vsub.f32 %v869, %v898
    %v906 = vsub.f32 %v870, %v901
    %v907 = vperm.slane %v745, 0
    %v908 = vperm.slane %v746, 0
    %v909 = vsel %vm76, %v907, %v908
    %v910 = vsel %vm77, %v907, %v908
    %v911 = vsel %vm78, %v907, %v908
    %v912 = vsel %vm79, %v907, %v908
    %913 = vmatpush.msra.mxu0 %v727
    %914 = vmatpush.msra.mxu0 %v726
    %915 = vmatpush.msra.mxu0 %v725
    %916 = vmatpush.msra.mxu0 %v724
    %917 = vmatpush.msra.mxu0 %v723
    %918 = vmatpush.msra.mxu0 %v722
    %919 = vmatpush.msra.mxu0 %v721
    %920 = vmatpush.msra.mxu0 %v720
    %921 = vmatpush.msra.mxu0 %v719
    %922 = vmatpush.msra.mxu0 %v718
    %923 = vmatpush.msra.mxu0 %v717
    %924 = vmatpush.msra.mxu0 %v716
    %925 = vmatpush.msra.mxu0 %v715
    %926 = vmatpush.msra.mxu0 %v714
    %927 = vmatpush.msra.mxu0 %v713
    %928 = vmatpush.msra.mxu0 %v712
    %929 = vmatmul.f32.gmra.mxu0 %v867
    %v930 = vpop.f32.mrf.mxu0
    %v931 = vadd.f32 %v909, %v930
    %932 = vmatmul.f32.gmra.mxu0 %v868
    %v933 = vpop.f32.mrf.mxu0
    %v934 = vadd.f32 %v910, %v933
    %935 = vmatmul.f32.gmra.mxu0 %v869
    %v936 = vpop.f32.mrf.mxu0
    %v937 = vadd.f32 %v911, %v936
    %938 = vmatmul.f32.gmra.mxu0 %v870
    %v939 = vpop.f32.mrf.mxu0
    %v940 = vadd.f32 %v912, %v939
    %941 = vdwg.mxu0
    %942 = vmatpush.msra.mxu0 %v743
    %943 = vmatpush.msra.mxu0 %v742
    %944 = vmatpush.msra.mxu0 %v741
    %945 = vmatpush.msra.mxu0 %v740
    %946 = vmatpush.msra.mxu0 %v739
    %947 = vmatpush.msra.mxu0 %v738
    %948 = vmatpush.msra.mxu0 %v737
    %949 = vmatpush.msra.mxu0 %v736
    %950 = vmatpush.msra.mxu0 %v735
    %951 = vmatpush.msra.mxu0 %v734
    %952 = vmatpush.msra.mxu0 %v733
    %953 = vmatpush.msra.mxu0 %v732
    %954 = vmatpush.msra.mxu0 %v731
    %955 = vmatpush.msra.mxu0 %v730
    %956 = vmatpush.msra.mxu0 %v729
    %957 = vmatpush.msra.mxu0 %v728
    %958 = vmatmul.f32.gmra.mxu0 %v903
    %v959 = vpop.f32.mrf.mxu0
    %v960 = vadd.f32 %v931, %v959
    %961 = vmatmul.f32.gmra.mxu0 %v904
    %v962 = vpop.f32.mrf.mxu0
    %v963 = vadd.f32 %v934, %v962
    %964 = vmatmul.f32.gmra.mxu0 %v905
    %v965 = vpop.f32.mrf.mxu0
    %v966 = vadd.f32 %v937, %v965
    %967 = vmatmul.f32.gmra.mxu0 %v906
    %v968 = vpop.f32.mrf.mxu0
    %v969 = vadd.f32 %v940, %v968
    %970 = vdwg.mxu0
    %v971 = vmax.f32 %v960, 0.0
    %v972 = vmax.f32 %v963, 0.0
    %v973 = vmax.f32 %v966, 0.0
    %v974 = vmax.f32 %v969, 0.0
    %v975 = vsel %vm76, %v971, 0.0
    %v976 = vsel %vm77, %v972, 0.0
    %v977 = vsel %vm78, %v973, 0.0
    %v978 = vsel %vm79, %v974, 0.0
    %v979 = vsel %vm76, 0.0, %v971
    %v980 = vsel %vm77, 0.0, %v972
    %v981 = vsel %vm78, 0.0, %v973
    %v982 = vsel %vm79, 0.0, %v974
    %987 = vrot.lane.b32.xlu0 %v979, 64
    %v988 = vpop.permute.xlu0 %987
    %989 = vrot.lane.b32.xlu0 %v980, 64
    %v990 = vpop.permute.xlu0 %989
    %991 = vrot.lane.b32.xlu0 %v981, 64
    %v992 = vpop.permute.xlu0 %991
    %993 = vrot.lane.b32.xlu0 %v982, 64
    %v994 = vpop.permute.xlu0 %993
    %v999 = vsel %vm88, %v975, %v988
    %v1000 = vsel %vm88, %v976, %v990
    %v1001 = vsel %vm88, %v977, %v992
    %v1002 = vsel %vm88, %v978, %v994
    %1007 = vrot.lane.b32.xlu0 %v999, 64
    %v1008 = vpop.permute.xlu0 %1007
    %1009 = vrot.lane.b32.xlu0 %v1000, 64
    %v1010 = vpop.permute.xlu0 %1009
    %1011 = vrot.lane.b32.xlu0 %v1001, 64
    %v1012 = vpop.permute.xlu0 %1011
    %1013 = vrot.lane.b32.xlu0 %v1002, 64
    %v1014 = vpop.permute.xlu0 %1013
    %v1019 = vsel %vm88, %v684, %v1008
    %v1020 = vsel %vm88, %v685, %v1010
    %v1021 = vsel %vm88, %v686, %v1012
    %v1022 = vsel %vm88, %v687, %v1014
    %v1023 = vld [vmem:[#allocation2 + $0x3c0] sm:$0xff]
    %v1024 = vld [vmem:[#allocation2 + $0x3c8] sm:$0xff]
    %v1025 = vld [vmem:[#allocation2 + $0x3d0] sm:$0xff]
    %v1026 = vld [vmem:[#allocation2 + $0x3d8] sm:$0xff]
    %v1027 = vld [vmem:[#allocation2 + $0x3e0] sm:$0xff]
    %v1028 = vld [vmem:[#allocation2 + $0x3e8] sm:$0xff]
    %v1029 = vld [vmem:[#allocation2 + $0x3f0] sm:$0xff]
    %v1030 = vld [vmem:[#allocation2 + $0x3f8] sm:$0xff]
    %v1031 = vld [vmem:[#allocation2 + $0x400] sm:$0xff]
    %v1032 = vld [vmem:[#allocation2 + $0x408] sm:$0xff]
    %v1033 = vld [vmem:[#allocation2 + $0x410] sm:$0xff]
    %v1034 = vld [vmem:[#allocation2 + $0x418] sm:$0xff]
    %v1035 = vld [vmem:[#allocation2 + $0x420] sm:$0xff]
    %v1036 = vld [vmem:[#allocation2 + $0x428] sm:$0xff]
    %v1037 = vld [vmem:[#allocation2 + $0x430] sm:$0xff]
    %v1038 = vld [vmem:[#allocation2 + $0x438] sm:$0xff]
    %v1039 = vld [vmem:[#allocation2 + $0x440] sm:$0xff]
    %v1040 = vld [vmem:[#allocation2 + $0x448] sm:$0xff]
    %v1041 = vld [vmem:[#allocation2 + $0x450] sm:$0xff]
    %v1042 = vld [vmem:[#allocation2 + $0x458] sm:$0xff]
    %v1043 = vld [vmem:[#allocation2 + $0x460] sm:$0xff]
    %v1044 = vld [vmem:[#allocation2 + $0x468] sm:$0xff]
    %v1045 = vld [vmem:[#allocation2 + $0x470] sm:$0xff]
    %v1046 = vld [vmem:[#allocation2 + $0x478] sm:$0xff]
    %v1047 = vld [vmem:[#allocation2 + $0x480] sm:$0xff]
    %v1048 = vld [vmem:[#allocation2 + $0x488] sm:$0xff]
    %v1049 = vld [vmem:[#allocation2 + $0x490] sm:$0xff]
    %v1050 = vld [vmem:[#allocation2 + $0x498] sm:$0xff]
    %v1051 = vld [vmem:[#allocation2 + $0x4a0] sm:$0xff]
    %v1052 = vld [vmem:[#allocation2 + $0x4a8] sm:$0xff]
    %v1053 = vld [vmem:[#allocation2 + $0x4b0] sm:$0xff]
    %v1054 = vld [vmem:[#allocation2 + $0x4b8] sm:$0xff]
    %v1055 = vld [vmem:[#allocation2 + $0x4c0] sm:$0xff]
    %v1056 = vld [vmem:[#allocation2 + $0x4c8] sm:$0xff]
    %v1057 = vld [vmem:[#allocation2 + $0x4d0] sm:$0xff]
    %v1058 = vld [vmem:[#allocation2 + $0x4d8] sm:$0xff]
    %v1059 = vld [vmem:[#allocation2 + $0x4e0] sm:$0xff]
    %v1060 = vld [vmem:[#allocation2 + $0x4e8] sm:$0xff]
    %v1061 = vld [vmem:[#allocation2 + $0x4f0] sm:$0xff]
    %v1062 = vld [vmem:[#allocation2 + $0x4f8] sm:$0xff]
    %v1063 = vld [vmem:[#allocation2 + $0x500] sm:$0xff]
    %v1064 = vld [vmem:[#allocation2 + $0x508] sm:$0xff]
    %v1065 = vld [vmem:[#allocation2 + $0x510] sm:$0xff]
    %v1066 = vld [vmem:[#allocation2 + $0x518] sm:$0xff]
    %v1067 = vld [vmem:[#allocation2 + $0x520] sm:$0xff]
    %v1068 = vld [vmem:[#allocation2 + $0x528] sm:$0xff]
    %v1069 = vld [vmem:[#allocation2 + $0x530] sm:$0xff]
    %v1070 = vld [vmem:[#allocation2 + $0x538] sm:$0xff]
    %v1071 = vld [vmem:[#allocation2 + $0x540] sm:$0xff]
    %v1072 = vld [vmem:[#allocation2 + $0x548] sm:$0xff]
    %v1073 = vld [vmem:[#allocation2 + $0x550] sm:$0xff]
    %v1074 = vld [vmem:[#allocation2 + $0x558] sm:$0xff]
    %v1075 = vld [vmem:[#allocation2 + $0x560] sm:$0xff]
    %v1076 = vld [vmem:[#allocation2 + $0x568] sm:$0xff]
    %v1077 = vld [vmem:[#allocation2 + $0x570] sm:$0xff]
    %v1078 = vld [vmem:[#allocation2 + $0x578] sm:$0xff]
    %v1079 = vld [vmem:[#allocation2 + $0x580] sm:$0xff]
    %v1080 = vld [vmem:[#allocation2 + $0x588] sm:$0xff]
    %v1081 = vld [vmem:[#allocation2 + $0x590] sm:$0xff]
    %v1082 = vld [vmem:[#allocation2 + $0x598] sm:$0xff]
    %v1083 = vld [vmem:[#allocation2 + $0x5a0] sm:$0xff]
    %v1084 = vld [vmem:[#allocation2 + $0x5a8] sm:$0xff]
    %v1085 = vld [vmem:[#allocation2 + $0x5b0] sm:$0xff]
    %v1086 = vld [vmem:[#allocation2 + $0x5b8] sm:$0xff]
    %v1087 = vld [vmem:[#allocation2 + $0x5c0] sm:$0xff]
    %v1088 = vld [vmem:[#allocation2 + $0x5c8] sm:$0xff]
    %v1089 = vld [vmem:[#allocation2 + $0x5d0] sm:$0xff]
    %v1090 = vld [vmem:[#allocation2 + $0x5d8] sm:$0xff]
    %v1091 = vld [vmem:[#allocation2 + $0x5e0] sm:$0xff]
    %v1092 = vld [vmem:[#allocation2 + $0x5e8] sm:$0xff]
    %v1093 = vld [vmem:[#allocation2 + $0x5f0] sm:$0xff]
    %v1094 = vld [vmem:[#allocation2 + $0x5f8] sm:$0xff]
    %v1095 = vld [vmem:[#allocation4 + $0x58] sm:$0x1]
    %v1096 = vld [vmem:[#allocation4 + $0x60] sm:$0x1]
    %v1097 = vld [vmem:[#allocation4 + $0x68] sm:$0x1]
    %v1098 = vsel %vm88, %v1008, 0
    %v1100 = vsel %vm88, %v1010, 0
    %v1102 = vsel %vm88, %v1012, 0
    %v1104 = vsel %vm88, %v1014, 0
    %1106 = vmatpush.msra.mxu0 %v1038
    %1107 = vmatpush.msra.mxu0 %v1037
    %1108 = vmatpush.msra.mxu0 %v1036
    %1109 = vmatpush.msra.mxu0 %v1035
    %1110 = vmatpush.msra.mxu0 %v1034
    %1111 = vmatpush.msra.mxu0 %v1033
    %1112 = vmatpush.msra.mxu0 %v1032
    %1113 = vmatpush.msra.mxu0 %v1031
    %1114 = vmatpush.msra.mxu0 %v1030
    %1115 = vmatpush.msra.mxu0 %v1029
    %1116 = vmatpush.msra.mxu0 %v1028
    %1117 = vmatpush.msra.mxu0 %v1027
    %1118 = vmatpush.msra.mxu0 %v1026
    %1119 = vmatpush.msra.mxu0 %v1025
    %1120 = vmatpush.msra.mxu0 %v1024
    %1121 = vmatpush.msra.mxu0 %v1023
    %1122 = vmatmul.f32.gmra.mxu0 %v452
    %v1123 = vpop.f32.mrf.mxu0
    %v1124 = vadd.f32 0.0, %v1123
    %1125 = vmatmul.f32.gmra.mxu0 %v453
    %v1126 = vpop.f32.mrf.mxu0
    %v1127 = vadd.f32 0.0, %v1126
    %1128 = vmatmul.f32.gmra.mxu0 %v454
    %v1129 = vpop.f32.mrf.mxu0
    %v1130 = vadd.f32 0.0, %v1129
    %1131 = vmatmul.f32.gmra.mxu0 %v455
    %v1132 = vpop.f32.mrf.mxu0
    %v1133 = vadd.f32 0.0, %v1132
    %1134 = vdwg.mxu0
    %1135 = vmatpush.msra.mxu0 %v1054
    %1136 = vmatpush.msra.mxu0 %v1053
    %1137 = vmatpush.msra.mxu0 %v1052
    %1138 = vmatpush.msra.mxu0 %v1051
    %1139 = vmatpush.msra.mxu0 %v1050
    %1140 = vmatpush.msra.mxu0 %v1049
    %1141 = vmatpush.msra.mxu0 %v1048
    %1142 = vmatpush.msra.mxu0 %v1047
    %1143 = vmatpush.msra.mxu0 %v1046
    %1144 = vmatpush.msra.mxu0 %v1045
    %1145 = vmatpush.msra.mxu0 %v1044
    %1146 = vmatpush.msra.mxu0 %v1043
    %1147 = vmatpush.msra.mxu0 %v1042
    %1148 = vmatpush.msra.mxu0 %v1041
    %1149 = vmatpush.msra.mxu0 %v1040
    %1150 = vmatpush.msra.mxu0 %v1039
    %1151 = vmatmul.f32.gmra.mxu0 %v1019
    %v1152 = vpop.f32.mrf.mxu0
    %v1153 = vadd.f32 %v1124, %v1152
    %1154 = vmatmul.f32.gmra.mxu0 %v1020
    %v1155 = vpop.f32.mrf.mxu0
    %v1156 = vadd.f32 %v1127, %v1155
    %1157 = vmatmul.f32.gmra.mxu0 %v1021
    %v1158 = vpop.f32.mrf.mxu0
    %v1159 = vadd.f32 %v1130, %v1158
    %1160 = vmatmul.f32.gmra.mxu0 %v1022
    %v1161 = vpop.f32.mrf.mxu0
    %v1162 = vadd.f32 %v1133, %v1161
    %1163 = vdwg.mxu0
    %1164 = vmatpush.msra.mxu0 0.0
    %1165 = vmatpush.msra.mxu0 0.0
    %1166 = vmatpush.msra.mxu0 0.0
    %1167 = vmatpush.msra.mxu0 0.0
    %1168 = vmatpush.msra.mxu0 0.0
    %1169 = vmatpush.msra.mxu0 0.0
    %1170 = vmatpush.msra.mxu0 0.0
    %1171 = vmatpush.msra.mxu0 0.0
    %1172 = vmatpush.msra.mxu0 %v1062
    %1173 = vmatpush.msra.mxu0 %v1061
    %1174 = vmatpush.msra.mxu0 %v1060
    %1175 = vmatpush.msra.mxu0 %v1059
    %1176 = vmatpush.msra.mxu0 %v1058
    %1177 = vmatpush.msra.mxu0 %v1057
    %1178 = vmatpush.msra.mxu0 %v1056
    %1179 = vmatpush.msra.mxu0 %v1055
    %1180 = vmatmul.f32.gmra.mxu0 %v1098
    %v1181 = vpop.f32.mrf.mxu0
    %v1182 = vadd.f32 %v1153, %v1181
    %1183 = vmatmul.f32.gmra.mxu0 %v1100
    %v1184 = vpop.f32.mrf.mxu0
    %v1185 = vadd.f32 %v1156, %v1184
    %1186 = vmatmul.f32.gmra.mxu0 %v1102
    %v1187 = vpop.f32.mrf.mxu0
    %v1188 = vadd.f32 %v1159, %v1187
    %1189 = vmatmul.f32.gmra.mxu0 %v1104
    %v1190 = vpop.f32.mrf.mxu0
    %v1191 = vadd.f32 %v1162, %v1190
    %1192 = vdwg.mxu0
    %v1194 = vsel %vm244, %v1191, 0
    %1196 = vmatpush.msra.mxu0 0.0
    %1197 = vmatpush.msra.mxu0 0.0
    %1198 = vmatpush.msra.mxu0 0.0
    %1199 = vmatpush.msra.mxu0 0.0
    %1200 = vmatpush.msra.mxu0 0.0
    %1201 = vmatpush.msra.mxu0 0.0
    %1202 = vmatpush.msra.mxu0 0.0
    %1203 = vmatpush.msra.mxu0 0.0
    %1204 = vmatpush.msra.mxu0 0.0
    %1205 = vmatpush.msra.mxu0 0.0
    %1206 = vmatpush.msra.mxu0 0.0
    %1207 = vmatpush.msra.mxu0 0.0
    %1208 = vmatpush.msra.mxu0 %v1194
    %1209 = vmatpush.msra.mxu0 %v1188
    %1210 = vmatpush.msra.mxu0 %v1185
    %1211 = vmatpush.msra.mxu0 %v1182
    %1212 = vmatmul.f32.gmra.mxu0 %v233
    %v1213 = vpop.f32.mrf.mxu0
    %v1214 = vadd.f32 0.0, %v1213
    %1215 = vmatmul.f32.gmra.mxu0 %v236
    %v1216 = vpop.f32.mrf.mxu0
    %v1217 = vadd.f32 0.0, %v1216
    %1218 = vmatmul.f32.gmra.mxu0 %v239
    %v1219 = vpop.f32.mrf.mxu0
    %v1220 = vadd.f32 0.0, %v1219
    %1221 = vmatmul.f32.gmra.mxu0 %v242
    %v1222 = vpop.f32.mrf.mxu0
    %v1223 = vadd.f32 0.0, %v1222
    %1224 = vdwg.mxu0
    %v1225 = vadd.f32 %v1182, %v1214
    %v1226 = vadd.f32 %v1185, %v1217
    %v1227 = vadd.f32 %v1188, %v1220
    %v1228 = vadd.f32 %v1191, %v1223
    %v1229 = vperm.slane %v1095, 0
    %v1230 = vadd.f32 %v1225, %v1229
    %v1231 = vadd.f32 %v1226, %v1229
    %v1232 = vadd.f32 %v1227, %v1229
    %v1233 = vadd.f32 %v1228, %v1229
    %v1234 = vsel %vm863, %v1230, 0.0
    %v1235 = vsel %vm864, %v1231, 0.0
    %v1236 = vsel %vm865, %v1232, 0.0
    %v1237 = vsel %vm866, %v1233, 0.0
    %v1239 = vsel %vm244, %v1237, 0
    %1241 = vmatpush.msra.mxu0 0.0
    %1242 = vmatpush.msra.mxu0 0.0
    %1243 = vmatpush.msra.mxu0 0.0
    %1244 = vmatpush.msra.mxu0 0.0
    %1245 = vmatpush.msra.mxu0 0.0
    %1246 = vmatpush.msra.mxu0 0.0
    %1247 = vmatpush.msra.mxu0 0.0
    %1248 = vmatpush.msra.mxu0 0.0
    %1249 = vmatpush.msra.mxu0 0.0
    %1250 = vmatpush.msra.mxu0 0.0
    %1251 = vmatpush.msra.mxu0 0.0
    %1252 = vmatpush.msra.mxu0 0.0
    %1253 = vmatpush.msra.mxu0 %v1239
    %1254 = vmatpush.msra.mxu0 %v1236
    %1255 = vmatpush.msra.mxu0 %v1235
    %1256 = vmatpush.msra.mxu0 %v1234
    %1257 = vmatmul.f32.gmra.mxu0 %v302
    %v1258 = vpop.f32.mrf.mxu0
    %v1259 = vadd.f32 0.0, %v1258
    %1260 = vmatmul.f32.gmra.mxu0 %v305
    %v1261 = vpop.f32.mrf.mxu0
    %v1262 = vadd.f32 0.0, %v1261
    %1263 = vmatmul.f32.gmra.mxu0 %v308
    %v1264 = vpop.f32.mrf.mxu0
    %v1265 = vadd.f32 0.0, %v1264
    %1266 = vmatmul.f32.gmra.mxu0 %v311
    %v1267 = vpop.f32.mrf.mxu0
    %v1268 = vadd.f32 0.0, %v1267
    %1269 = vdwg.mxu0
    %v1270 = vsub.f32 %v1234, %v1259
    %v1271 = vsub.f32 %v1235, %v1262
    %v1272 = vsub.f32 %v1236, %v1265
    %v1273 = vsub.f32 %v1237, %v1268
    %v1274 = vperm.slane %v1096, 0
    %v1275 = vperm.slane %v1097, 0
    %v1276 = vsel %vm76, %v1274, %v1275
    %v1277 = vsel %vm77, %v1274, %v1275
    %v1278 = vsel %vm78, %v1274, %v1275
    %v1279 = vsel %vm79, %v1274, %v1275
    %1280 = vmatpush.msra.mxu0 %v1078
    %1281 = vmatpush.msra.mxu0 %v1077
    %1282 = vmatpush.msra.mxu0 %v1076
    %1283 = vmatpush.msra.mxu0 %v1075
    %1284 = vmatpush.msra.mxu0 %v1074
    %1285 = vmatpush.msra.mxu0 %v1073
    %1286 = vmatpush.msra.mxu0 %v1072
    %1287 = vmatpush.msra.mxu0 %v1071
    %1288 = vmatpush.msra.mxu0 %v1070
    %1289 = vmatpush.msra.mxu0 %v1069
    %1290 = vmatpush.msra.mxu0 %v1068
    %1291 = vmatpush.msra.mxu0 %v1067
    %1292 = vmatpush.msra.mxu0 %v1066
    %1293 = vmatpush.msra.mxu0 %v1065
    %1294 = vmatpush.msra.mxu0 %v1064
    %1295 = vmatpush.msra.mxu0 %v1063
    %1296 = vmatmul.f32.gmra.mxu0 %v1234
    %v1297 = vpop.f32.mrf.mxu0
    %v1298 = vadd.f32 %v1276, %v1297
    %1299 = vmatmul.f32.gmra.mxu0 %v1235
    %v1300 = vpop.f32.mrf.mxu0
    %v1301 = vadd.f32 %v1277, %v1300
    %1302 = vmatmul.f32.gmra.mxu0 %v1236
    %v1303 = vpop.f32.mrf.mxu0
    %v1304 = vadd.f32 %v1278, %v1303
    %1305 = vmatmul.f32.gmra.mxu0 %v1237
    %v1306 = vpop.f32.mrf.mxu0
    %v1307 = vadd.f32 %v1279, %v1306
    %1308 = vdwg.mxu0
    %1309 = vmatpush.msra.mxu0 %v1094
    %1310 = vmatpush.msra.mxu0 %v1093
    %1311 = vmatpush.msra.mxu0 %v1092
    %1312 = vmatpush.msra.mxu0 %v1091
    %1313 = vmatpush.msra.mxu0 %v1090
    %1314 = vmatpush.msra.mxu0 %v1089
    %1315 = vmatpush.msra.mxu0 %v1088
    %1316 = vmatpush.msra.mxu0 %v1087
    %1317 = vmatpush.msra.mxu0 %v1086
    %1318 = vmatpush.msra.mxu0 %v1085
    %1319 = vmatpush.msra.mxu0 %v1084
    %1320 = vmatpush.msra.mxu0 %v1083
    %1321 = vmatpush.msra.mxu0 %v1082
    %1322 = vmatpush.msra.mxu0 %v1081
    %1323 = vmatpush.msra.mxu0 %v1080
    %1324 = vmatpush.msra.mxu0 %v1079
    %1325 = vmatmul.f32.gmra.mxu0 %v1270
    %v1326 = vpop.f32.mrf.mxu0
    %v1327 = vadd.f32 %v1298, %v1326
    %1328 = vmatmul.f32.gmra.mxu0 %v1271
    %v1329 = vpop.f32.mrf.mxu0
    %v1330 = vadd.f32 %v1301, %v1329
    %1331 = vmatmul.f32.gmra.mxu0 %v1272
    %v1332 = vpop.f32.mrf.mxu0
    %v1333 = vadd.f32 %v1304, %v1332
    %1334 = vmatmul.f32.gmra.mxu0 %v1273
    %v1335 = vpop.f32.mrf.mxu0
    %v1336 = vadd.f32 %v1307, %v1335
    %1337 = vdwg.mxu0
    %v1338 = vmax.f32 %v1327, 0.0
    %v1339 = vmax.f32 %v1330, 0.0
    %v1340 = vmax.f32 %v1333, 0.0
    %v1341 = vmax.f32 %v1336, 0.0
    %v1343 = vsel %vm231, %v57, 0
    %v1346 = vsel %vm244, %v1341, 0
    %1348 = vmatpush.msra.mxu0 0.0
    %1349 = vmatpush.msra.mxu0 0.0
    %1350 = vmatpush.msra.mxu0 0.0
    %1351 = vmatpush.msra.mxu0 0.0
    %1352 = vmatpush.msra.mxu0 0.0
    %1353 = vmatpush.msra.mxu0 0.0
    %1354 = vmatpush.msra.mxu0 0.0
    %1355 = vmatpush.msra.mxu0 0.0
    %1356 = vmatpush.msra.mxu0 0.0
    %1357 = vmatpush.msra.mxu0 0.0
    %1358 = vmatpush.msra.mxu0 0.0
    %1359 = vmatpush.msra.mxu0 0.0
    %1360 = vmatpush.msra.mxu0 %v1346
    %1361 = vmatpush.msra.mxu0 %v1340
    %1362 = vmatpush.msra.mxu0 %v1339
    %1363 = vmatpush.msra.mxu0 %v1338
    %1364 = vmatmul.f32.gmra.mxu0 %v1343
    %v1365 = vpop.f32.mrf.mxu0
    %v1366 = vadd.f32 0.0, %v1365
    %1367 = vdwg.mxu0
    %v1369 = vsel %vm231, %v58, 0
    %1371 = vmatpush.msra.mxu0 0.0
    %1372 = vmatpush.msra.mxu0 0.0
    %1373 = vmatpush.msra.mxu0 0.0
    %1374 = vmatpush.msra.mxu0 0.0
    %1375 = vmatpush.msra.mxu0 0.0
    %1376 = vmatpush.msra.mxu0 0.0
    %1377 = vmatpush.msra.mxu0 0.0
    %1378 = vmatpush.msra.mxu0 0.0
    %1379 = vmatpush.msra.mxu0 0.0
    %1380 = vmatpush.msra.mxu0 0.0
    %1381 = vmatpush.msra.mxu0 0.0
    %1382 = vmatpush.msra.mxu0 0.0
    %1383 = vmatpush.msra.mxu0 %v1346
    %1384 = vmatpush.msra.mxu0 %v1340
    %1385 = vmatpush.msra.mxu0 %v1339
    %1386 = vmatpush.msra.mxu0 %v1338
    %1387 = vmatmul.f32.gmra.mxu0 %v1369
    %v1388 = vpop.f32.mrf.mxu0
    %v1389 = vadd.f32 0.0, %v1388
    %1390 = vdwg.mxu0
    %1392 = vrot.lane.b32.xlu0 %v1389, 64
    %v1393 = vpop.permute.xlu0 %1392
    %v1395 = vsel %vm88, %v1366, %v1393
    %v1396 = vld [vmem:[#allocation2 + $0x600] sm:$0xff]
    %v1397 = vld [vmem:[#allocation2 + $0x608] sm:$0xff]
    %v1398 = vld [vmem:[#allocation2 + $0x610] sm:$0xff]
    %v1399 = vld [vmem:[#allocation2 + $0x618] sm:$0xff]
    %v1400 = vld [vmem:[#allocation2 + $0x620] sm:$0xff]
    %v1401 = vld [vmem:[#allocation2 + $0x628] sm:$0xff]
    %v1402 = vld [vmem:[#allocation2 + $0x630] sm:$0xff]
    %v1403 = vld [vmem:[#allocation2 + $0x638] sm:$0xff]
    %v1404 = vld [vmem:[#allocation2 + $0x640] sm:$0xff]
    %v1405 = vld [vmem:[#allocation2 + $0x648] sm:$0xff]
    %v1406 = vld [vmem:[#allocation2 + $0x650] sm:$0xff]
    %v1407 = vld [vmem:[#allocation2 + $0x658] sm:$0xff]
    %v1408 = vld [vmem:[#allocation2 + $0x660] sm:$0xff]
    %v1409 = vld [vmem:[#allocation2 + $0x668] sm:$0xff]
    %v1410 = vld [vmem:[#allocation2 + $0x670] sm:$0xff]
    %v1411 = vld [vmem:[#allocation2 + $0x678] sm:$0xff]
    %v1412 = vld [vmem:[#allocation4 + $0x70] sm:$0x1]
    %v1413 = vperm.slane %v1412, 0
    %1414 = vmatpush.msra.mxu0 %v1411
    %1415 = vmatpush.msra.mxu0 %v1410
    %1416 = vmatpush.msra.mxu0 %v1409
    %1417 = vmatpush.msra.mxu0 %v1408
    %1418 = vmatpush.msra.mxu0 %v1407
    %1419 = vmatpush.msra.mxu0 %v1406
    %1420 = vmatpush.msra.mxu0 %v1405
    %1421 = vmatpush.msra.mxu0 %v1404
    %1422 = vmatpush.msra.mxu0 %v1403
    %1423 = vmatpush.msra.mxu0 %v1402
    %1424 = vmatpush.msra.mxu0 %v1401
    %1425 = vmatpush.msra.mxu0 %v1400
    %1426 = vmatpush.msra.mxu0 %v1399
    %1427 = vmatpush.msra.mxu0 %v1398
    %1428 = vmatpush.msra.mxu0 %v1397
    %1429 = vmatpush.msra.mxu0 %v1396
    %1430 = vmatmul.f32.gmra.mxu0 %v1395
    %v1431 = vpop.f32.mrf.mxu0
    %v1432 = vadd.f32 %v1413, %v1431
    %1433 = vdwg.mxu0
    %vm1434 = vcmask 1024
    %1435 = vst.msk [vmem:[%s4] sm:$0x3] %vm1434, %v1432
    // Predicated region
    $region26: #{fwd.1} parent=1 // pred_check
      _
    $region27: #{fwd.1} parent=1 // pred_check_branch
      %1437 = sbr.rel (0) target = $region29
    $region28: #{fwd.1} parent=1 // pred_region
      _
    $region29: #{fwd.1} parent=1 // pred_fallthru
      _
    // Predicated region
    $region30: #{fwd.1} parent=1 // pred_check
      _
    $region31: #{fwd.1} parent=1 // pred_check_branch
      %1439 = sbr.rel (0) target = $region33
    $region32: #{fwd.1} parent=1 // pred_region
      _
    $region33: #{fwd.1} parent=1 // pred_fallthru
      _
    %1440 = vsyncpa [#allocation3], 1
    %1441 = vsyncpa [#allocation5], 1

</llo_original>
